<compile_context>
chip_gen: v7x
topology: tpu7x:2x2x1
jax: 0.10.0
libtpu: 0.0.40
codegen_flags: <defaults>
</compile_context>

<pallas_src>
import functools

import jax
import jax.numpy as jnp
from jax import lax
from jax.experimental import pallas as pl
from jax.experimental.pallas import tpu as pltpu

EPS = 1e-5                 # PyTorch BatchNorm2d default eps
LANES = 128                # lane width -> channel padding target
MXU_DTYPE = jnp.bfloat16   # MXU operand / activation-intermediate dtype


def _round_up(x, m):
    return (x + m - 1) // m * m


def _pick_slab_rows(hp, wp, target_m=256):
    """Pooled-image rows per conv slab so slab_m = rows * wp is ~target_m."""
    r = max(1, min(hp, target_m // max(wp, 1)))
    while hp % r:
        r -= 1
    return r


def _vmem_limit_bytes():
    # Perf review: a hardcoded 32 MiB scoped limit binds long before hardware
    # does on v5e/v6e (128 MiB physical).  Derive it from the chip; cap at
    # 96 MiB and fall back to 64 MiB if the query is unavailable.
    try:
        cap = int(pltpu.get_tpu_info().vmem_capacity_bytes)
    except Exception:
        cap = 0
    if cap < (32 << 20):
        return 64 << 20
    return min((cap * 3) // 4, 96 << 20)


# ----------------------------- Pallas kernels ------------------------------

def _fill_halo_tile(pad_ref, interior):
    """Write a zero-halo'd (hp+2, wp+2, c) tile from an (hp, wp, c) interior.

    Only the two border rows get a dedicated zero store; the left/right zero
    columns are folded into the (contiguous, sublane-offset-0) interior-row
    store, so the tile is written exactly once per image."""
    hp, wp, c = interior.shape
    dt = pad_ref.dtype
    zrow = jnp.zeros((1, wp + 2, c), dt)
    pad_ref[0:1, :, :] = zrow
    pad_ref[hp + 1:hp + 2, :, :] = zrow
    zcol = jnp.zeros((hp, 1, c), dt)
    pad_ref[1:hp + 1, :, :] = jnp.concatenate(
        [zcol, interior.astype(dt), zcol], axis=1)


def _conv3x3_store(pad_ref, w_ref, y_ref, psum_ref, psq_ref, slab_rows):
    """3x3 conv over the zero-padded bf16 tile as 9 shifted MXU matmuls with
    f32 accumulation, M-chunked over row slabs so each slab's accumulator stays
    vreg-resident.  Also emits per-image partial BN statistics (from f32)."""
    hp, wp, cin_p = pad_ref.shape[0] - 2, pad_ref.shape[1] - 2, pad_ref.shape[2]
    cout_p = y_ref.shape[-1]
    m = slab_rows * wp
    ssum = jnp.zeros((1, cout_p), jnp.float32)
    ssq = jnp.zeros((1, cout_p), jnp.float32)
    for s in range(hp // slab_rows):                        # static trip count
        r0 = s * slab_rows
        acc = jnp.zeros((m, cout_p), jnp.float32)
        for dy in range(3):
            for dx in range(3):
                xs = pad_ref[r0 + dy:r0 + dy + slab_rows, dx:dx + wp, :]
                xs = xs.reshape(m, cin_p)                   # bf16; wp % 8 == 0
                acc = acc + jnp.dot(xs, w_ref[dy * 3 + dx],
                                    preferred_element_type=jnp.float32)
        y_ref[0, r0 * wp:r0 * wp + m, :] = acc.astype(y_ref.dtype)
        ssum = ssum + jnp.sum(acc, axis=0, keepdims=True)
        ssq = ssq + jnp.sum(acc * acc, axis=0, keepdims=True)
    psum_ref[0] = ssum
    psq_ref[0] = ssq


def _pool_conv_stats_kernel(x_ref, w_ref, y_ref, psum_ref, psq_ref, pad_ref,
                            *, slab_rows):
    # x_ref   : (1, H, Wp, 2*CIN_P) bf16  one image; pool column pairs in lanes
    # w_ref   : (9, CIN_P, C1_P)    bf16  conv1 taps, tap index = dy*3+dx
    # y_ref   : (1, Hp*Wp, C1_P)    bf16  pre-BN conv1 output
    # psum/psq: (1, 1, C1_P)        f32   per-image partial BN1 stats
    # pad_ref : (Hp+2, Wp+2, CIN_P) bf16  zero-halo'd pooled-image scratch
    hp, wp, cin_p = pad_ref.shape[0] - 2, pad_ref.shape[1] - 2, pad_ref.shape[2]

    # fused MaxPool2d(2): column pairs come pre-paired in the lane dim, row
    # pairs are reduced here (max commutes with the bf16 cast).
    x = x_ref[0]                                            # (H, Wp, 2*CIN_P)
    colmax = jnp.maximum(x[:, :, :cin_p], x[:, :, cin_p:])  # (H, Wp, CIN_P)
    r = colmax.reshape(hp, 2, wp, cin_p)                    # leading split only
    pooled = jnp.maximum(r[:, 0], r[:, 1])                  # (Hp, Wp, CIN_P)

    _fill_halo_tile(pad_ref, pooled)
    _conv3x3_store(pad_ref, w_ref, y_ref, psum_ref, psq_ref, slab_rows)


def _bn_relu_conv_stats_kernel(y1_ref, scale_ref, shift_ref, w_ref,
                               y2_ref, psum_ref, psq_ref, pad_ref, *, slab_rows):
    # y1_ref     : (1, Hp*Wp, C1_P)   bf16  pre-BN conv1 output for this image
    # scale/shift: (1, C1_P)          f32   precomputed BN1 affine
    # w_ref      : (9, C1_P, C2_P)    bf16  conv2 taps
    # y2_ref     : (1, Hp*Wp, C2_P)   f32   pre-BN conv2 output
    # psum/psq   : (1, 1, C2_P)       f32   per-image partial BN2 stats
    # pad_ref    : (Hp+2, Wp+2, C1_P) bf16  scratch
    hp, wp, c1_p = pad_ref.shape[0] - 2, pad_ref.shape[1] - 2, pad_ref.shape[2]

    a = jnp.maximum(y1_ref[0].astype(jnp.float32) * scale_ref[...]
                    + shift_ref[...], 0.0)                  # BN1 + ReLU (f32)
    _fill_halo_tile(pad_ref, a.reshape(hp, wp, c1_p))
    _conv3x3_store(pad_ref, w_ref, y2_ref, psum_ref, psq_ref, slab_rows)


# ------------------------------ pallas_call wrapper -------------------------

def _conv_block_call(kernel, inputs, in_specs, *, n, hp, wp, cin_p, cout_p,
                     y_dtype):
    hpwp = hp * wp
    return pl.pallas_call(
        kernel,
        out_shape=(jax.ShapeDtypeStruct((n, hpwp, cout_p), y_dtype),
                   jax.ShapeDtypeStruct((n, 1, cout_p), jnp.float32),
                   jax.ShapeDtypeStruct((n, 1, cout_p), jnp.float32)),
        grid_spec=pltpu.PrefetchScalarGridSpec(
            num_scalar_prefetch=0, grid=(n,),
            in_specs=in_specs,
            out_specs=(pl.BlockSpec((1, hpwp, cout_p), lambda b: (b, 0, 0)),
                       pl.BlockSpec((1, 1, cout_p), lambda b: (b, 0, 0)),
                       pl.BlockSpec((1, 1, cout_p), lambda b: (b, 0, 0))),
            # bf16 halo scratch: half the footprint and half the bytes moved by
            # the 9 shifted-slice copies (perf-review item).
            scratch_shapes=[pltpu.VMEM((hp + 2, wp + 2, cin_p), MXU_DTYPE)]),
        compiler_params=pltpu.CompilerParams(
            dimension_semantics=("parallel",),
            vmem_limit_bytes=_vmem_limit_bytes()),
    )(*inputs)


# ------------------------------ JAX glue ------------------------------------

def _pack_weight(w_oihw, cin_p, cout_p):
    # (Cout, Cin, 3, 3) -> (3, 3, Cin, Cout) -> pad -> (9, cin_p, cout_p) bf16
    cout, cin, kh, kw = w_oihw.shape
    w = jnp.transpose(w_oihw.astype(jnp.float32), (2, 3, 1, 0))
    w = jnp.pad(w, ((0, 0), (0, 0), (0, cin_p - cin), (0, cout_p - cout)))
    return w.reshape(kh * kw, cin_p, cout_p).astype(MXU_DTYPE)


def _bn_affine(psum, psq, gamma, beta, count, c_pad):
    # BatchNorm2d training-mode (biased) batch stats -> per-channel scale/shift.
    # Padded channels have zero weights => zero stats; zero-padded gamma/beta
    # keep them exactly zero through the affine (no NaNs, var+eps > 0).
    # TODO(synk): E[x^2]-E[x]^2 in f32 can lose precision when |mean| >> std;
    # switch to a two-pass mean/var if tighter accuracy is ever required.
    s = jnp.sum(psum, axis=(0, 1))
    sq = jnp.sum(psq, axis=(0, 1))
    mean = s / count
    var = jnp.maximum(sq / count - mean * mean, 0.0)   # guard f32 cancellation
    g = jnp.pad(gamma.astype(jnp.float32), (0, c_pad - gamma.shape[0]))
    b = jnp.pad(beta.astype(jnp.float32), (0, c_pad - beta.shape[0]))
    inv = g / jnp.sqrt(var + EPS)
    return inv.reshape(1, c_pad), (b - mean * inv).reshape(1, c_pad)


def down_forward(x_nchw, params):
    """Down(in_channel, out_channel).forward — NCHW in, NCHW out (f32)."""
    w1, g1, b1, w2, g2, b2 = params
    n, cin, h, w = x_nchw.shape
    c1 = w1.shape[0]                 # mid_channel (== out_channel by default)
    c2 = w2.shape[0]                 # out_channel
    assert h % 2 == 0 and w % 2 == 0, "MaxPool2d(2) needs even spatial dims"
    hp, wp = h // 2, w // 2
    # TODO(synk): add a padded fallback path instead of asserting on width.
    assert wp % 8 == 0, "pooled width must be a multiple of 8 (sublane aligned)"
    cin_p = _round_up(cin, LANES)
    c1_p = _round_up(c1, LANES)
    c2_p = _round_up(c2, LANES)
    slab = _pick_slab_rows(hp, wp)

    # NCHW f32 -> NHWC bf16 (halves pass-1 input DMA; pooling max commutes with
    # bf16 rounding), pad channels to the lane width, pack 2x2-pool column
    # pairs into the lane dim (contiguous reshape, no data blowup).
    x = jnp.transpose(x_nchw, (0, 2, 3, 1)).astype(MXU_DTYPE)
    x = jnp.pad(x, ((0, 0), (0, 0), (0, 0), (0, cin_p - cin)))
    x = x.reshape(n, h, wp, 2 * cin_p)

    w1m = _pack_weight(w1, cin_p, c1_p)
    w2m = _pack_weight(w2, c1_p, c2_p)

    # pass 1: fused maxpool + conv1 + partial BN1 stats (y1 emitted as bf16)
    y1, ps1, pq1 = _conv_block_call(
        functools.partial(_pool_conv_stats_kernel, slab_rows=slab),
        (x, w1m),
        in_specs=[pl.BlockSpec((1, h, wp, 2 * cin_p), lambda b: (b, 0, 0, 0)),
                  pl.BlockSpec((9, cin_p, c1_p), lambda b: (0, 0, 0))],
        n=n, hp=hp, wp=wp, cin_p=cin_p, cout_p=c1_p, y_dtype=MXU_DTYPE)
    scale1, shift1 = _bn_affine(ps1, pq1, g1, b1, n * hp * wp, c1_p)

    # pass 2: fused BN1 affine + ReLU + conv2 + partial BN2 stats
    y2, ps2, pq2 = _conv_block_call(
        functools.partial(_bn_relu_conv_stats_kernel, slab_rows=slab),
        (y1, scale1, shift1, w2m),
        in_specs=[pl.BlockSpec((1, hp * wp, c1_p), lambda b: (b, 0, 0)),
                  pl.BlockSpec((1, c1_p), lambda b: (0, 0)),
                  pl.BlockSpec((1, c1_p), lambda b: (0, 0)),
                  pl.BlockSpec((9, c1_p, c2_p), lambda b: (0, 0, 0))],
        n=n, hp=hp, wp=wp, cin_p=c1_p, cout_p=c2_p, y_dtype=jnp.float32)
    scale2, shift2 = _bn_affine(ps2, pq2, g2, b2, n * hp * wp, c2_p)

    # epilogue: BN2 affine + ReLU, left to XLA so it fuses with the channel
    # slice + NCHW transpose (perf-review item: saves one HBM round trip of y2).
    out = jnp.maximum(y2 * scale2 + shift2, 0.0)
    out = out.reshape(n, hp, wp, c2_p)[:, :, :, :c2]   # drop channel padding
    return jnp.transpose(out, (0, 3, 1, 2))            # -> NCHW


# ------------------------------ reference -----------------------------------

def _reference_down(x_nchw, params):
    w1, g1, b1, w2, g2, b2 = params
    x = x_nchw.astype(jnp.float32)
    n, c, h, w = x.shape
    x = x.reshape(n, c, h // 2, 2, w // 2, 2).max(axis=(3, 5))   # MaxPool2d(2)

    def conv_bn_relu(x, wgt, gamma, beta):
        y = lax.conv_general_dilated(
            x, wgt, window_strides=(1, 1), padding=((1, 1), (1, 1)),
            dimension_numbers=("NCHW", "OIHW", "NCHW"))
        mean = y.mean(axis=(0, 2, 3), keepdims=True)
        var = ((y - mean) ** 2).mean(axis=(0, 2, 3), keepdims=True)
        yn = (y - mean) / jnp.sqrt(var + EPS)
        yn = yn * gamma.reshape(1, -1, 1, 1) + beta.reshape(1, -1, 1, 1)
        return jnp.maximum(yn, 0.0)

    x = conv_bn_relu(x, w1, g1, b1)
    x = conv_bn_relu(x, w2, g2, b2)
    return x


# ------------------------------ main -----------------------------------------

if __name__ == "__main__":
    N, CIN, H, W = 2, 4, 16, 16
    COUT = 8            # Down(4, 8); mid_channel defaults to out_channel
    key = jax.random.PRNGKey(0)
    kx, kw1, kw2, kg1, kb1, kg2, kb2 = jax.random.split(key, 7)

    x = jax.random.normal(kx, (N, CIN, H, W), dtype=jnp.float32)
    w1 = 0.1 * jax.random.normal(kw1, (COUT, CIN, 3, 3), dtype=jnp.float32)
    w2 = 0.1 * jax.random.normal(kw2, (COUT, COUT, 3, 3), dtype=jnp.float32)
    g1 = 1.0 + 0.1 * jax.random.normal(kg1, (COUT,), dtype=jnp.float32)
    b1 = 0.1 * jax.random.normal(kb1, (COUT,), dtype=jnp.float32)
    g2 = 1.0 + 0.1 * jax.random.normal(kg2, (COUT,), dtype=jnp.float32)
    b2 = 0.1 * jax.random.normal(kb2, (COUT,), dtype=jnp.float32)
    params = (w1, g1, b1, w2, g2, b2)

    out = jax.block_until_ready(down_forward(x, params))
    ref = jax.block_until_ready(_reference_down(x, params))

    assert out.shape == (N, COUT, H // 2, W // 2), out.shape
    # bf16 MXU operands, a bf16 input cast and a bf16 y1 intermediate (f32
    # accumulation + f32 BN math) vs an all-f32 reference: after two
    # conv + BatchNorm(batch-stat) layers the error is a few 1e-3 rms, so a
    # bf16-appropriate tolerance is used (this is a deliberate perf/accuracy
    # tradeoff, per the performance review).
    assert jnp.allclose(out, ref, atol=5e-2, rtol=2e-2), float(
        jnp.max(jnp.abs(out - ref)))
    print("KERNEL_OK")
</pallas_src>

<mosaic_0001>
module attributes {stable_mosaic.version = 11 : i64} {
  func.func @_pool_conv_stats_kernel(%arg0: i32, %arg1: memref<1x16x8x256xbf16, #tpu.memory_space<vmem>>, %arg2: memref<9x128x128xbf16, #tpu.memory_space<vmem>>, %arg3: memref<1x64x128xbf16, #tpu.memory_space<vmem>>, %arg4: memref<1x1x128xf32, #tpu.memory_space<vmem>>, %arg5: memref<1x1x128xf32, #tpu.memory_space<vmem>>, %arg6: memref<10x10x128xbf16, #tpu.memory_space<vmem>>) attributes {dimension_semantics = [#tpu.dimension_semantics<parallel>], iteration_bounds = array<i64: 2>, scalar_prefetch = 0 : i64, scratch_operands = 1 : i64, tpu.core_type = #tpu.core_type<tc>, window_params = [{transform_indices = @transform_0, window_bounds = array<i64: 1, 16, 8, 256>}, {pipeline_mode = #tpu.pipeline_mode<synchronous>, transform_indices = @transform_1, window_bounds = array<i64: 9, 128, 128>}, {transform_indices = @transform_2, window_bounds = array<i64: 1, 64, 128>}, {transform_indices = @transform_3, window_bounds = array<i64: 1, 1, 128>}, {transform_indices = @transform_4, window_bounds = array<i64: 1, 1, 128>}]} {
    %c0 = arith.constant 0 : index
    %c0_0 = arith.constant 0 : index
    %c0_1 = arith.constant 0 : index
    %c0_2 = arith.constant 0 : index
    %0 = vector.load %arg1[%c0, %c0_0, %c0_1, %c0_2] : memref<1x16x8x256xbf16, #tpu.memory_space<vmem>>, vector<1x16x8x256xbf16>
    %1 = vector.shape_cast %0 : vector<1x16x8x256xbf16> to vector<16x8x256xbf16>
    %2 = vector.extract_strided_slice %1 {offsets = [0, 0, 0], sizes = [16, 8, 128], strides = [1, 1, 1]} : vector<16x8x256xbf16> to vector<16x8x128xbf16>
    %3 = vector.extract_strided_slice %1 {offsets = [0, 0, 128], sizes = [16, 8, 128], strides = [1, 1, 1]} : vector<16x8x256xbf16> to vector<16x8x128xbf16>
    %4 = arith.maximumf %2, %3 : vector<16x8x128xbf16>
    %5 = vector.shape_cast %4 : vector<16x8x128xbf16> to vector<8x2x8x128xbf16>
    %6 = vector.extract_strided_slice %5 {offsets = [0, 0, 0, 0], sizes = [8, 1, 8, 128], strides = [1, 1, 1, 1]} : vector<8x2x8x128xbf16> to vector<8x1x8x128xbf16>
    %7 = vector.shape_cast %6 : vector<8x1x8x128xbf16> to vector<8x8x128xbf16>
    %8 = vector.extract_strided_slice %5 {offsets = [0, 1, 0, 0], sizes = [8, 1, 8, 128], strides = [1, 1, 1, 1]} : vector<8x2x8x128xbf16> to vector<8x1x8x128xbf16>
    %9 = vector.shape_cast %8 : vector<8x1x8x128xbf16> to vector<8x8x128xbf16>
    %10 = arith.maximumf %7, %9 : vector<8x8x128xbf16>
    %cst = arith.constant 0.000000e+00 : bf16
    %11 = vector.broadcast %cst : bf16 to vector<1x10x128xbf16>
    %c0_3 = arith.constant 0 : index
    %c0_4 = arith.constant 0 : index
    %c0_5 = arith.constant 0 : index
    %12 = vector.load %arg6[%c0_3, %c0_4, %c0_5] : memref<10x10x128xbf16, #tpu.memory_space<vmem>>, vector<1x10x128xbf16>
    tpu.vector_store %arg6[%c0_3, %c0_4, %c0_5], %11 {strides = array<i32>} : memref<10x10x128xbf16, #tpu.memory_space<vmem>>, vector<1x10x128xbf16>,
    %c9 = arith.constant 9 : index
    %c0_6 = arith.constant 0 : index
    %c0_7 = arith.constant 0 : index
    %13 = vector.load %arg6[%c9, %c0_6, %c0_7] : memref<10x10x128xbf16, #tpu.memory_space<vmem>>, vector<1x10x128xbf16>
    tpu.vector_store %arg6[%c9, %c0_6, %c0_7], %11 {strides = array<i32>} : memref<10x10x128xbf16, #tpu.memory_space<vmem>>, vector<1x10x128xbf16>,
    %cst_8 = arith.constant 0.000000e+00 : bf16
    %14 = vector.broadcast %cst_8 : bf16 to vector<8x1x128xbf16>
    %15 = tpu.concatenate %14, %10, %14 in 1 : vector<8x1x128xbf16>, vector<8x8x128xbf16>, vector<8x1x128xbf16> -> vector<8x10x128xbf16>
    %c1 = arith.constant 1 : index
    %c0_9 = arith.constant 0 : index
    %c0_10 = arith.constant 0 : index
    %16 = vector.load %arg6[%c1, %c0_9, %c0_10] : memref<10x10x128xbf16, #tpu.memory_space<vmem>>, vector<8x10x128xbf16>
    tpu.vector_store %arg6[%c1, %c0_9, %c0_10], %15 {strides = array<i32>} : memref<10x10x128xbf16, #tpu.memory_space<vmem>>, vector<8x10x128xbf16>,
    %cst_11 = arith.constant 0.000000e+00 : f32
    %17 = vector.broadcast %cst_11 : f32 to vector<1x128xf32>
    %cst_12 = arith.constant 0.000000e+00 : f32
    %18 = vector.broadcast %cst_12 : f32 to vector<1x128xf32>
    %cst_13 = arith.constant 0.000000e+00 : f32
    %19 = vector.broadcast %cst_13 : f32 to vector<64x128xf32>
    %c0_14 = arith.constant 0 : index
    %c0_15 = arith.constant 0 : index
    %c0_16 = arith.constant 0 : index
    %20 = vector.load %arg6[%c0_14, %c0_15, %c0_16] : memref<10x10x128xbf16, #tpu.memory_space<vmem>>, vector<8x8x128xbf16>
    %21 = vector.shape_cast %20 : vector<8x8x128xbf16> to vector<64x128xbf16>
    %c0_17 = arith.constant 0 : index
    %c0_18 = arith.constant 0 : index
    %c0_19 = arith.constant 0 : index
    %22 = vector.load %arg2[%c0_17, %c0_18, %c0_19] : memref<9x128x128xbf16, #tpu.memory_space<vmem>>, vector<1x128x128xbf16>
    %23 = vector.shape_cast %22 : vector<1x128x128xbf16> to vector<128x128xbf16>
    %cst_20 = arith.constant dense<0.000000e+00> : vector<64x128xf32>
    %24 = tpu.matmul %21, %23, %cst_20 {dimension_numbers = #tpu.dot_dimension_numbers<[1], [0], [0], [1], [0, 0, 1, 1], [], []>} : vector<64x128xbf16>, vector<128x128xbf16>, vector<64x128xf32> -> vector<64x128xf32>
    %25 = arith.addf %19, %24 : vector<64x128xf32>
    %c0_21 = arith.constant 0 : index
    %c1_22 = arith.constant 1 : index
    %c0_23 = arith.constant 0 : index
    %26 = vector.load %arg6[%c0_21, %c1_22, %c0_23] : memref<10x10x128xbf16, #tpu.memory_space<vmem>>, vector<8x8x128xbf16>
    %27 = vector.shape_cast %26 : vector<8x8x128xbf16> to vector<64x128xbf16>
    %c1_24 = arith.constant 1 : index
    %c0_25 = arith.constant 0 : index
    %c0_26 = arith.constant 0 : index
    %28 = vector.load %arg2[%c1_24, %c0_25, %c0_26] : memref<9x128x128xbf16, #tpu.memory_space<vmem>>, vector<1x128x128xbf16>
    %29 = vector.shape_cast %28 : vector<1x128x128xbf16> to vector<128x128xbf16>
    %cst_27 = arith.constant dense<0.000000e+00> : vector<64x128xf32>
    %30 = tpu.matmul %27, %29, %cst_27 {dimension_numbers = #tpu.dot_dimension_numbers<[1], [0], [0], [1], [0, 0, 1, 1], [], []>} : vector<64x128xbf16>, vector<128x128xbf16>, vector<64x128xf32> -> vector<64x128xf32>
    %31 = arith.addf %25, %30 : vector<64x128xf32>
    %c0_28 = arith.constant 0 : index
    %c2 = arith.constant 2 : index
    %c0_29 = arith.constant 0 : index
    %32 = vector.load %arg6[%c0_28, %c2, %c0_29] : memref<10x10x128xbf16, #tpu.memory_space<vmem>>, vector<8x8x128xbf16>
    %33 = vector.shape_cast %32 : vector<8x8x128xbf16> to vector<64x128xbf16>
    %c2_30 = arith.constant 2 : index
    %c0_31 = arith.constant 0 : index
    %c0_32 = arith.constant 0 : index
    %34 = vector.load %arg2[%c2_30, %c0_31, %c0_32] : memref<9x128x128xbf16, #tpu.memory_space<vmem>>, vector<1x128x128xbf16>
    %35 = vector.shape_cast %34 : vector<1x128x128xbf16> to vector<128x128xbf16>
    %cst_33 = arith.constant dense<0.000000e+00> : vector<64x128xf32>
    %36 = tpu.matmul %33, %35, %cst_33 {dimension_numbers = #tpu.dot_dimension_numbers<[1], [0], [0], [1], [0, 0, 1, 1], [], []>} : vector<64x128xbf16>, vector<128x128xbf16>, vector<64x128xf32> -> vector<64x128xf32>
    %37 = arith.addf %31, %36 : vector<64x128xf32>
    %c1_34 = arith.constant 1 : index
    %c0_35 = arith.constant 0 : index
    %c0_36 = arith.constant 0 : index
    %38 = vector.load %arg6[%c1_34, %c0_35, %c0_36] : memref<10x10x128xbf16, #tpu.memory_space<vmem>>, vector<8x8x128xbf16>
    %39 = vector.shape_cast %38 : vector<8x8x128xbf16> to vector<64x128xbf16>
    %c3 = arith.constant 3 : index
    %c0_37 = arith.constant 0 : index
    %c0_38 = arith.constant 0 : index
    %40 = vector.load %arg2[%c3, %c0_37, %c0_38] : memref<9x128x128xbf16, #tpu.memory_space<vmem>>, vector<1x128x128xbf16>
    %41 = vector.shape_cast %40 : vector<1x128x128xbf16> to vector<128x128xbf16>
    %cst_39 = arith.constant dense<0.000000e+00> : vector<64x128xf32>
    %42 = tpu.matmul %39, %41, %cst_39 {dimension_numbers = #tpu.dot_dimension_numbers<[1], [0], [0], [1], [0, 0, 1, 1], [], []>} : vector<64x128xbf16>, vector<128x128xbf16>, vector<64x128xf32> -> vector<64x128xf32>
    %43 = arith.addf %37, %42 : vector<64x128xf32>
    %c1_40 = arith.constant 1 : index
    %c1_41 = arith.constant 1 : index
    %c0_42 = arith.constant 0 : index
    %44 = vector.load %arg6[%c1_40, %c1_41, %c0_42] : memref<10x10x128xbf16, #tpu.memory_space<vmem>>, vector<8x8x128xbf16>
    %45 = vector.shape_cast %44 : vector<8x8x128xbf16> to vector<64x128xbf16>
    %c4 = arith.constant 4 : index
    %c0_43 = arith.constant 0 : index
    %c0_44 = arith.constant 0 : index
    %46 = vector.load %arg2[%c4, %c0_43, %c0_44] : memref<9x128x128xbf16, #tpu.memory_space<vmem>>, vector<1x128x128xbf16>
    %47 = vector.shape_cast %46 : vector<1x128x128xbf16> to vector<128x128xbf16>
    %cst_45 = arith.constant dense<0.000000e+00> : vector<64x128xf32>
    %48 = tpu.matmul %45, %47, %cst_45 {dimension_numbers = #tpu.dot_dimension_numbers<[1], [0], [0], [1], [0, 0, 1, 1], [], []>} : vector<64x128xbf16>, vector<128x128xbf16>, vector<64x128xf32> -> vector<64x128xf32>
    %49 = arith.addf %43, %48 : vector<64x128xf32>
    %c1_46 = arith.constant 1 : index
    %c2_47 = arith.constant 2 : index
    %c0_48 = arith.constant 0 : index
    %50 = vector.load %arg6[%c1_46, %c2_47, %c0_48] : memref<10x10x128xbf16, #tpu.memory_space<vmem>>, vector<8x8x128xbf16>
    %51 = vector.shape_cast %50 : vector<8x8x128xbf16> to vector<64x128xbf16>
    %c5 = arith.constant 5 : index
    %c0_49 = arith.constant 0 : index
    %c0_50 = arith.constant 0 : index
    %52 = vector.load %arg2[%c5, %c0_49, %c0_50] : memref<9x128x128xbf16, #tpu.memory_space<vmem>>, vector<1x128x128xbf16>
    %53 = vector.shape_cast %52 : vector<1x128x128xbf16> to vector<128x128xbf16>
    %cst_51 = arith.constant dense<0.000000e+00> : vector<64x128xf32>
    %54 = tpu.matmul %51, %53, %cst_51 {dimension_numbers = #tpu.dot_dimension_numbers<[1], [0], [0], [1], [0, 0, 1, 1], [], []>} : vector<64x128xbf16>, vector<128x128xbf16>, vector<64x128xf32> -> vector<64x128xf32>
    %55 = arith.addf %49, %54 : vector<64x128xf32>
    %c2_52 = arith.constant 2 : index
    %c0_53 = arith.constant 0 : index
    %c0_54 = arith.constant 0 : index
    %56 = vector.load %arg6[%c2_52, %c0_53, %c0_54] : memref<10x10x128xbf16, #tpu.memory_space<vmem>>, vector<8x8x128xbf16>
    %57 = vector.shape_cast %56 : vector<8x8x128xbf16> to vector<64x128xbf16>
    %c6 = arith.constant 6 : index
    %c0_55 = arith.constant 0 : index
    %c0_56 = arith.constant 0 : index
    %58 = vector.load %arg2[%c6, %c0_55, %c0_56] : memref<9x128x128xbf16, #tpu.memory_space<vmem>>, vector<1x128x128xbf16>
    %59 = vector.shape_cast %58 : vector<1x128x128xbf16> to vector<128x128xbf16>
    %cst_57 = arith.constant dense<0.000000e+00> : vector<64x128xf32>
    %60 = tpu.matmul %57, %59, %cst_57 {dimension_numbers = #tpu.dot_dimension_numbers<[1], [0], [0], [1], [0, 0, 1, 1], [], []>} : vector<64x128xbf16>, vector<128x128xbf16>, vector<64x128xf32> -> vector<64x128xf32>
    %61 = arith.addf %55, %60 : vector<64x128xf32>
    %c2_58 = arith.constant 2 : index
    %c1_59 = arith.constant 1 : index
    %c0_60 = arith.constant 0 : index
    %62 = vector.load %arg6[%c2_58, %c1_59, %c0_60] : memref<10x10x128xbf16, #tpu.memory_space<vmem>>, vector<8x8x128xbf16>
    %63 = vector.shape_cast %62 : vector<8x8x128xbf16> to vector<64x128xbf16>
    %c7 = arith.constant 7 : index
    %c0_61 = arith.constant 0 : index
    %c0_62 = arith.constant 0 : index
    %64 = vector.load %arg2[%c7, %c0_61, %c0_62] : memref<9x128x128xbf16, #tpu.memory_space<vmem>>, vector<1x128x128xbf16>
    %65 = vector.shape_cast %64 : vector<1x128x128xbf16> to vector<128x128xbf16>
    %cst_63 = arith.constant dense<0.000000e+00> : vector<64x128xf32>
    %66 = tpu.matmul %63, %65, %cst_63 {dimension_numbers = #tpu.dot_dimension_numbers<[1], [0], [0], [1], [0, 0, 1, 1], [], []>} : vector<64x128xbf16>, vector<128x128xbf16>, vector<64x128xf32> -> vector<64x128xf32>
    %67 = arith.addf %61, %66 : vector<64x128xf32>
    %c2_64 = arith.constant 2 : index
    %c2_65 = arith.constant 2 : index
    %c0_66 = arith.constant 0 : index
    %68 = vector.load %arg6[%c2_64, %c2_65, %c0_66] : memref<10x10x128xbf16, #tpu.memory_space<vmem>>, vector<8x8x128xbf16>
    %69 = vector.shape_cast %68 : vector<8x8x128xbf16> to vector<64x128xbf16>
    %c8 = arith.constant 8 : index
    %c0_67 = arith.constant 0 : index
    %c0_68 = arith.constant 0 : index
    %70 = vector.load %arg2[%c8, %c0_67, %c0_68] : memref<9x128x128xbf16, #tpu.memory_space<vmem>>, vector<1x128x128xbf16>
    %71 = vector.shape_cast %70 : vector<1x128x128xbf16> to vector<128x128xbf16>
    %cst_69 = arith.constant dense<0.000000e+00> : vector<64x128xf32>
    %72 = tpu.matmul %69, %71, %cst_69 {dimension_numbers = #tpu.dot_dimension_numbers<[1], [0], [0], [1], [0, 0, 1, 1], [], []>} : vector<64x128xbf16>, vector<128x128xbf16>, vector<64x128xf32> -> vector<64x128xf32>
    %73 = arith.addf %67, %72 : vector<64x128xf32>
    %74 = arith.truncf %73 : vector<64x128xf32> to vector<64x128xbf16>
    %c0_70 = arith.constant 0 : index
    %c0_71 = arith.constant 0 : index
    %c0_72 = arith.constant 0 : index
    %75 = vector.load %arg3[%c0_70, %c0_71, %c0_72] : memref<1x64x128xbf16, #tpu.memory_space<vmem>>, vector<1x64x128xbf16>
    %76 = vector.shape_cast %75 : vector<1x64x128xbf16> to vector<64x128xbf16>
    %77 = vector.shape_cast %74 : vector<64x128xbf16> to vector<1x64x128xbf16>
    tpu.vector_store %arg3[%c0_70, %c0_71, %c0_72], %77 {strides = array<i32>} : memref<1x64x128xbf16, #tpu.memory_space<vmem>>, vector<1x64x128xbf16>,
    %cst_73 = arith.constant dense<0.000000e+00> : vector<128xf32>
    %78 = vector.multi_reduction <add>, %73, %cst_73 [0] : vector<64x128xf32> to vector<128xf32>
    %79 = vector.shape_cast %78 : vector<128xf32> to vector<1x128xf32>
    %80 = arith.addf %17, %79 : vector<1x128xf32>
    %81 = arith.mulf %73, %73 : vector<64x128xf32>
    %cst_74 = arith.constant dense<0.000000e+00> : vector<128xf32>
    %82 = vector.multi_reduction <add>, %81, %cst_74 [0] : vector<64x128xf32> to vector<128xf32>
    %83 = vector.shape_cast %82 : vector<128xf32> to vector<1x128xf32>
    %84 = arith.addf %18, %83 : vector<1x128xf32>
    %c0_75 = arith.constant 0 : index
    %c0_76 = arith.constant 0 : index
    %c0_77 = arith.constant 0 : index
    %85 = vector.load %arg4[%c0_75, %c0_76, %c0_77] : memref<1x1x128xf32, #tpu.memory_space<vmem>>, vector<1x1x128xf32>
    %86 = vector.shape_cast %85 : vector<1x1x128xf32> to vector<1x128xf32>
    %87 = vector.shape_cast %80 : vector<1x128xf32> to vector<1x1x128xf32>
    tpu.vector_store %arg4[%c0_75, %c0_76, %c0_77], %87 {strides = array<i32>} : memref<1x1x128xf32, #tpu.memory_space<vmem>>, vector<1x1x128xf32>,
    %c0_78 = arith.constant 0 : index
    %c0_79 = arith.constant 0 : index
    %c0_80 = arith.constant 0 : index
    %88 = vector.load %arg5[%c0_78, %c0_79, %c0_80] : memref<1x1x128xf32, #tpu.memory_space<vmem>>, vector<1x1x128xf32>
    %89 = vector.shape_cast %88 : vector<1x1x128xf32> to vector<1x128xf32>
    %90 = vector.shape_cast %84 : vector<1x128xf32> to vector<1x1x128xf32>
    tpu.vector_store %arg5[%c0_78, %c0_79, %c0_80], %90 {strides = array<i32>} : memref<1x1x128xf32, #tpu.memory_space<vmem>>, vector<1x1x128xf32>,
    return
  }
  func.func @transform_0(%arg0: i32) -> (i32, i32, i32, i32) {
    %c0_i32 = arith.constant 0 : i32
    %c0_i32_0 = arith.constant 0 : i32
    %c0_i32_1 = arith.constant 0 : i32
    %c0_i32_2 = arith.constant 0 : i32
    return %arg0, %c0_i32, %c0_i32_0, %c0_i32_1 : i32, i32, i32, i32
  }
  func.func @transform_1(%arg0: i32) -> (i32, i32, i32) {
    %c0_i32 = arith.constant 0 : i32
    %c0_i32_0 = arith.constant 0 : i32
    %c0_i32_1 = arith.constant 0 : i32
    %c0_i32_2 = arith.constant 0 : i32
    return %c0_i32, %c0_i32_0, %c0_i32_1 : i32, i32, i32
  }
  func.func @transform_2(%arg0: i32) -> (i32, i32, i32) {
    %c0_i32 = arith.constant 0 : i32
    %c0_i32_0 = arith.constant 0 : i32
    %c0_i32_1 = arith.constant 0 : i32
    return %arg0, %c0_i32, %c0_i32_0 : i32, i32, i32
  }
  func.func @transform_3(%arg0: i32) -> (i32, i32, i32) {
    %c0_i32 = arith.constant 0 : i32
    %c0_i32_0 = arith.constant 0 : i32
    %c0_i32_1 = arith.constant 0 : i32
    return %arg0, %c0_i32, %c0_i32_0 : i32, i32, i32
  }
  func.func @transform_4(%arg0: i32) -> (i32, i32, i32) {
    %c0_i32 = arith.constant 0 : i32
    %c0_i32_0 = arith.constant 0 : i32
    %c0_i32_1 = arith.constant 0 : i32
    return %arg0, %c0_i32, %c0_i32_0 : i32, i32, i32
  }
}

</mosaic_0001>

<llo_original>
// kernel: tpu_custom_call.1
$region0: #{tpu_custom_call.1}
  #allocation0 [shape = 'u32[]', space=smem, size = 0x4, offset = 0x4, fixed_abs, tag = 'smem constant byte address 0x4 - core index']
  #allocation1 [shape = 'u32[144,128]{1,0:T(1,128)}', space=vmem, size = 0x12000, scoped, tag = 'internal scratch']
  #allocation2 [shape = 'bf16[10,10,128]{2,1,0:T(8,128)(2,1)}', space=vmem, size = 0xa000, scoped, tag = 'scratch operand']
  %s0 = inlined_call_operand.hbm [shape: bf16[2,16,8,256], index: 0, kind: input, shape index: {}]
  %s1 = inlined_call_operand.hbm [shape: bf16[9,128,128], index: 1, kind: input, shape index: {}]
  %s2 = inlined_call_operand.hbm [shape: bf16[2,64,128], index: 2, kind: output, shape index: {0}]
  %s3 = inlined_call_operand.hbm [shape: f32[2,1,128], index: 3, kind: output, shape index: {1}]
  %s4 = inlined_call_operand.hbm [shape: f32[2,1,128], index: 4, kind: output, shape index: {2}]
  %5 = xla_tuple %s2, %s3, %s4
  %s6 = sld [smem:[#allocation0]]
  $region65: #{tpu_custom_call.1} parent=0
    _
  %s8 = ssub.s32 1, %s6
  %s9 = scalar_select 0, %s8, %s6
  $region1: #{tpu_custom_call.1} parent=0
    #allocation3 [shape = 'u8[131072]{0}', space=vmem, size = 0x20000, scoped, tag = 'input window, operand 0']
    #allocation4 [shape = 's32[2]{0}', space=sflag, size = 0x8, scoped, tag = 'scoped memory for tpu_custom_call.1']
    #allocation5 [shape = 's32[2]{0}', space=sflag, size = 0x8, scoped, tag = 'scoped memory for tpu_custom_call.1']
    #allocation6 [shape = 'u8[294912]{0}', space=vmem, size = 0x48000, scoped, tag = 'input window, operand 1, single buffered']
    #allocation7 [shape = 's32[1]{0}', space=sflag, size = 0x4, scoped, tag = 'scoped memory for tpu_custom_call.1']
    #allocation8 [shape = 'u8[32768]{0}', space=vmem, size = 0x8000, scoped, tag = 'output window, operand 0']
    #allocation9 [shape = 'u8[1024]{0}', space=vmem, size = 0x400, scoped, tag = 'output window, operand 1']
    #allocation10 [shape = 's32[2]{0}', space=sflag, size = 0x8, scoped, tag = 'scoped memory for tpu_custom_call.1']
    #allocation11 [shape = 'u8[1024]{0}', space=vmem, size = 0x400, scoped, tag = 'output window, operand 2']
    %10 = vsyncpa [#allocation4], 0
    %s11 = scalar_lea.sflag [#allocation4], 1
    %12 = vsyncpa %s11, 0
    %13 = vsyncpa [#allocation7], 0
    %14 = vsyncpa [#allocation5], 0
    %s15 = scalar_lea.sflag [#allocation5], 1
    %16 = vsyncpa %s15, 0
    %17 = vsyncpa [#allocation10], 0
    %s18 = scalar_lea.sflag [#allocation10], 1
    %19 = vsyncpa %s18, 0
    loop: start=0, step=1, limit=4
    $region2: #{tpu_custom_call.1} parent=1 // loop_pre_header
      _
    $region3: #{tpu_custom_call.1} parent=1 // loop_header
      %s21 = sphi 0, %s25
      %p22 = scmp.ge.s32.totalorder %s21, 4
      %s31 = sphi 0, %s33
      %s34 = sphi 0, %s31
      %s35 = sphi 0, %s34
      %s51 = sphi 0, %s35
      %s55 = sphi 0, %s55
      %s57 = sphi 0, %s55
      %s58 = sphi 0, %s57
      %s72 = sphi 0, %s58
      %s78 = sphi 0, %s80
      %s81 = sphi 0, %s78
      %s82 = sphi 0, %s81
      %s98 = sphi 0, %s82
      %s104 = sphi 0, %s106
      %s107 = sphi 0, %s104
      %s108 = sphi 0, %s107
      %s124 = sphi 0, %s108
      %s130 = sphi 0, %s132
      %s133 = sphi 0, %s130
      %s134 = sphi 0, %s133
      %s150 = sphi 0, %s134
    $region4: #{tpu_custom_call.1} parent=1 // loop_header_branch
      %24 = sbr.rel (%p22) target = $region8
    $region5: #{tpu_custom_call.1} parent=1 // loop_body
      %s26 = ssub.s32 %s21, 1
      %s27 = ssub.s32 %s21, 2
      %s28 = sadd.s32 %s21, 1
      %s29 = ssub.s32 %s21, %s28
      %p30 = scmp.eq.s32.totalorder %s29, 0
      %s32 = sadd.s32 %s31, 1
      %s33 = scalar_select %p30, %s31, %s32
      %p36 = pneg %p30
      %p37 = scmp.eq.s32.totalorder %s21, 1
      %p38 = por %p36, %p37
      %p39 = scmp.ne.s32.totalorder %s31, %s34
      %p40 = scmp.eq.s32.totalorder %s21, 0
      %p41 = por %p39, %p40
      %p42 = scmp.ne.s32.totalorder %s31, %s34
      %p43 = scmp.eq.s32.totalorder %s26, 1
      %p44 = por %p42, %p43
      %p45 = scmp.ne.s32.totalorder %s34, %s35
      %p46 = scmp.eq.s32.totalorder %s26, 0
      %p47 = por %p45, %p46
      %p48 = scmp.ne.s32.totalorder %s34, %s35
      %p49 = scmp.eq.s32.totalorder %s27, 1
      %p50 = por %p48, %p49
      %p52 = scmp.ne.s32.totalorder %s35, %s51
      %p53 = scmp.eq.s32.totalorder %s27, 0
      %p54 = por %p52, %p53
      %s56 = sadd.s32 %s55, 1
      %p59 = scmp.eq.s32.totalorder %s21, 1
      %p60 = scmp.ne.s32.totalorder %s55, %s57
      %p61 = scmp.eq.s32.totalorder %s21, 0
      %p62 = por %p60, %p61
      %p63 = scmp.ne.s32.totalorder %s55, %s57
      %p64 = scmp.eq.s32.totalorder %s26, 1
      %p65 = por %p63, %p64
      %p66 = scmp.ne.s32.totalorder %s57, %s58
      %p67 = scmp.eq.s32.totalorder %s26, 0
      %p68 = por %p66, %p67
      %p69 = scmp.ne.s32.totalorder %s57, %s58
      %p70 = scmp.eq.s32.totalorder %s27, 1
      %p71 = por %p69, %p70
      %p73 = scmp.ne.s32.totalorder %s58, %s72
      %p74 = scmp.eq.s32.totalorder %s27, 0
      %p75 = por %p73, %p74
      %s76 = ssub.s32 %s21, %s28
      %p77 = scmp.eq.s32.totalorder %s76, 0
      %s79 = sadd.s32 %s78, 1
      %s80 = scalar_select %p77, %s78, %s79
      %p83 = pneg %p77
      %p84 = scmp.eq.s32.totalorder %s21, 1
      %p85 = por %p83, %p84
      %p86 = scmp.ne.s32.totalorder %s78, %s81
      %p87 = scmp.eq.s32.totalorder %s21, 0
      %p88 = por %p86, %p87
      %p89 = scmp.ne.s32.totalorder %s78, %s81
      %p90 = scmp.eq.s32.totalorder %s26, 1
      %p91 = por %p89, %p90
      %p92 = scmp.ne.s32.totalorder %s81, %s82
      %p93 = scmp.eq.s32.totalorder %s26, 0
      %p94 = por %p92, %p93
      %p95 = scmp.ne.s32.totalorder %s81, %s82
      %p96 = scmp.eq.s32.totalorder %s27, 1
      %p97 = por %p95, %p96
      %p99 = scmp.ne.s32.totalorder %s82, %s98
      %p100 = scmp.eq.s32.totalorder %s27, 0
      %p101 = por %p99, %p100
      %s102 = ssub.s32 %s21, %s28
      %p103 = scmp.eq.s32.totalorder %s102, 0
      %s105 = sadd.s32 %s104, 1
      %s106 = scalar_select %p103, %s104, %s105
      %p109 = pneg %p103
      %p110 = scmp.eq.s32.totalorder %s21, 1
      %p111 = por %p109, %p110
      %p112 = scmp.ne.s32.totalorder %s104, %s107
      %p113 = scmp.eq.s32.totalorder %s21, 0
      %p114 = por %p112, %p113
      %p115 = scmp.ne.s32.totalorder %s104, %s107
      %p116 = scmp.eq.s32.totalorder %s26, 1
      %p117 = por %p115, %p116
      %p118 = scmp.ne.s32.totalorder %s107, %s108
      %p119 = scmp.eq.s32.totalorder %s26, 0
      %p120 = por %p118, %p119
      %p121 = scmp.ne.s32.totalorder %s107, %s108
      %p122 = scmp.eq.s32.totalorder %s27, 1
      %p123 = por %p121, %p122
      %p125 = scmp.ne.s32.totalorder %s108, %s124
      %p126 = scmp.eq.s32.totalorder %s27, 0
      %p127 = por %p125, %p126
      %s128 = ssub.s32 %s21, %s28
      %p129 = scmp.eq.s32.totalorder %s128, 0
      %s131 = sadd.s32 %s130, 1
      %s132 = scalar_select %p129, %s130, %s131
      %p135 = pneg %p129
      %p136 = scmp.eq.s32.totalorder %s21, 1
      %p137 = por %p135, %p136
      %p138 = scmp.ne.s32.totalorder %s130, %s133
      %p139 = scmp.eq.s32.totalorder %s21, 0
      %p140 = por %p138, %p139
      %p141 = scmp.ne.s32.totalorder %s130, %s133
      %p142 = scmp.eq.s32.totalorder %s26, 1
      %p143 = por %p141, %p142
      %p144 = scmp.ne.s32.totalorder %s133, %s134
      %p145 = scmp.eq.s32.totalorder %s26, 0
      %p146 = por %p144, %p145
      %p147 = scmp.ne.s32.totalorder %s133, %s134
      %p148 = scmp.eq.s32.totalorder %s27, 1
      %p149 = por %p147, %p148
      %p151 = scmp.ne.s32.totalorder %s134, %s150
      %p152 = scmp.eq.s32.totalorder %s27, 0
      %p153 = por %p151, %p152
      %p154 = scmp.le.s32.totalorder 1, %s21
      %p155 = scmp.lt.s32.totalorder %s21, 3
      %p156 = pnand %p154, %p155
      %p157 = pneg %p156
      // Predicated region
      $region9: #{tpu_custom_call.1} parent=5 // pred_check
        _
      $region10: #{tpu_custom_call.1} parent=5 // pred_check_branch
        %159 = sbr.rel (%p156) target = $region12
      $region11: #{tpu_custom_call.1} parent=5 // pred_region
        %s160 = ssub.s32 %s21, 1
        // Predicated region
        $region13: #{tpu_custom_call.1} parent=11 // pred_check
          %p161 = pneg %p68
        $region14: #{tpu_custom_call.1} parent=11 // pred_check_branch
          %163 = sbr.rel (%p161) target = $region16
        $region15: #{tpu_custom_call.1} parent=11 // pred_region
          %s165 = ssub.s32 9216, 9216
          %166 = vsyncadd [#allocation7], %s165
          %s167 = sshll.u32 [#allocation6], 4
          %s168 = int_to_ptr.vmem [resolvable:$true] %s167
          %173 = dma.hbm_to_vmem [thread:$0]  %s1, 9216, %s168, [#allocation7], 64, 64, 4
        $region16: #{tpu_custom_call.1} parent=11 // pred_fallthru
          _
      $region12: #{tpu_custom_call.1} parent=5 // pred_fallthru
        _
      %p174 = scmp.lt.s32.totalorder %s21, 2
      // Predicated region
      $region17: #{tpu_custom_call.1} parent=5 // pred_check
        %p175 = pneg %p174
      $region18: #{tpu_custom_call.1} parent=5 // pred_check_branch
        %177 = sbr.rel (%p175) target = $region20
      $region19: #{tpu_custom_call.1} parent=5 // pred_region
        // Predicated region
        $region21: #{tpu_custom_call.1} parent=19 // pred_check
          %p178 = pneg %p41
        $region22: #{tpu_custom_call.1} parent=19 // pred_check_branch
          %180 = sbr.rel (%p178) target = $region24
        $region23: #{tpu_custom_call.1} parent=19 // pred_region
          %s181 = sand.u32 %s31, 1
          %s182 = scalar_lea.sflag [#allocation4], %s181
          %s183 = sand.u32 %s31, 1
          %s184 = smul.addr %s183, 128
          %s185 = scalar_lea.vmem [#allocation3], %s184
          %s187 = ssub.s32 2048, 2048
          %188 = vsyncadd %s182, %s187
          %s189 = smul.addr %s21, 32
          %s190 = smul.addr %s189, 64
          %s191 = scalar_lea.hbm %s0, %s190
          %s192 = sshll.u32 %s185, 4
          %s193 = int_to_ptr.vmem [resolvable:$true] %s192
          %198 = dma.hbm_to_vmem [thread:$0]  %s191, 2048, %s193, %s182, 128, 128, 8
        $region24: #{tpu_custom_call.1} parent=19 // pred_fallthru
          _
      $region20: #{tpu_custom_call.1} parent=5 // pred_fallthru
        _
      %p199 = scmp.le.s32.totalorder 1, %s21
      %p200 = scmp.lt.s32.totalorder %s21, 3
      %p201 = pnand %p199, %p200
      %p202 = pneg %p201
      // Predicated region
      $region25: #{tpu_custom_call.1} parent=5 // pred_check
        _
      $region26: #{tpu_custom_call.1} parent=5 // pred_check_branch
        %204 = sbr.rel (%p201) target = $region28
      $region27: #{tpu_custom_call.1} parent=5 // pred_region
        %s205 = ssub.s32 %s21, 1
        %s206 = sand.u32 %s34, 1
        %s207 = scalar_lea.sflag [#allocation4], %s206
        %s208 = sand.u32 %s34, 1
        %s209 = smul.addr %s208, 128
        %s210 = scalar_lea.vmem [#allocation3], %s209
        // Predicated region
        $region29: #{tpu_custom_call.1} parent=27 // pred_check
          %p211 = pneg %p47
        $region30: #{tpu_custom_call.1} parent=27 // pred_check_branch
          %213 = sbr.rel (%p211) target = $region32
        $region31: #{tpu_custom_call.1} parent=27 // pred_region
          %214 = dma.done %s207, 2048
        $region32: #{tpu_custom_call.1} parent=27 // pred_fallthru
          _
        // Predicated region
        $region33: #{tpu_custom_call.1} parent=27 // pred_check
          %p215 = pneg %p68
        $region34: #{tpu_custom_call.1} parent=27 // pred_check_branch
          %217 = sbr.rel (%p215) target = $region36
        $region35: #{tpu_custom_call.1} parent=27 // pred_region
          %218 = dma.done [#allocation7], 9216
        $region36: #{tpu_custom_call.1} parent=27 // pred_fallthru
          _
        %s219 = sand.u32 %s34, 1
        %s220 = scalar_lea.sflag [#allocation4], %s219
        %s221 = sand.u32 %s34, 1
        %s222 = smul.addr %s221, 128
        %s223 = scalar_lea.vmem [#allocation3], %s222
        %p224 = pneg %p47
        %p225 = pneg %p44
        %p226 = pneg %p68
        %p227 = pneg %p65
        %p228 = pneg %p94
        %p229 = pneg %p91
        %s230 = sand.u32 %s81, 1
        %s231 = scalar_lea.sflag [#allocation5], %s230
        %s232 = sand.u32 %s81, 1
        %s233 = smul.addr %s232, 32
        %s234 = scalar_lea.vmem [#allocation8], %s233
        %p235 = pneg %p120
        %p236 = pneg %p117
        %s237 = sand.u32 %s26, 1
        %s238 = scalar_lea.sflag [#allocation10], %s237
        %s239 = sand.u32 %s107, 1
        %s240 = scalar_lea.vmem [#allocation9], %s239
        %p241 = pneg %p146
        %p242 = pneg %p143
        %s243 = sand.u32 %s26, 1
        %s244 = scalar_lea.sflag [#allocation10], %s243
        %s245 = sand.u32 %s133, 1
        %s246 = scalar_lea.vmem [#allocation11], %s245
        %v248 = vld [vmem:[%s210] sm:$0xff]
        %v249 = vld [vmem:[%s210 + $0x8] sm:$0xff]
        %v250 = vld [vmem:[%s210 + $0x10] sm:$0xff]
        %v251 = vld [vmem:[%s210 + $0x18] sm:$0xff]
        %v252 = vld [vmem:[%s210 + $0x20] sm:$0xff]
        %v253 = vld [vmem:[%s210 + $0x28] sm:$0xff]
        %v254 = vld [vmem:[%s210 + $0x30] sm:$0xff]
        %v255 = vld [vmem:[%s210 + $0x38] sm:$0xff]
        %v256 = vld [vmem:[%s210 + $0x40] sm:$0xff]
        %v257 = vld [vmem:[%s210 + $0x48] sm:$0xff]
        %v258 = vld [vmem:[%s210 + $0x50] sm:$0xff]
        %v259 = vld [vmem:[%s210 + $0x58] sm:$0xff]
        %v260 = vld [vmem:[%s210 + $0x60] sm:$0xff]
        %v261 = vld [vmem:[%s210 + $0x68] sm:$0xff]
        %v262 = vld [vmem:[%s210 + $0x70] sm:$0xff]
        %v263 = vld [vmem:[%s210 + $0x78] sm:$0xff]
        %v280 = vrot.slane %v248, 4
        %v281 = vrot.slane %v249, 4
        %v282 = vrot.slane %v250, 4
        %v283 = vrot.slane %v251, 4
        %v284 = vrot.slane %v252, 4
        %v285 = vrot.slane %v253, 4
        %v286 = vrot.slane %v254, 4
        %v287 = vrot.slane %v255, 4
        %v288 = vrot.slane %v256, 4
        %v289 = vrot.slane %v257, 4
        %v290 = vrot.slane %v258, 4
        %v291 = vrot.slane %v259, 4
        %v292 = vrot.slane %v260, 4
        %v293 = vrot.slane %v261, 4
        %v294 = vrot.slane %v262, 4
        %v295 = vrot.slane %v263, 4
        %v312 = vmax.bf16 %v248, %v280
        %v313 = vmax.bf16 %v249, %v281
        %v314 = vmax.bf16 %v250, %v282
        %v315 = vmax.bf16 %v251, %v283
        %v316 = vmax.bf16 %v252, %v284
        %v317 = vmax.bf16 %v253, %v285
        %v318 = vmax.bf16 %v254, %v286
        %v319 = vmax.bf16 %v255, %v287
        %v320 = vmax.bf16 %v256, %v288
        %v321 = vmax.bf16 %v257, %v289
        %v322 = vmax.bf16 %v258, %v290
        %v323 = vmax.bf16 %v259, %v291
        %v324 = vmax.bf16 %v260, %v292
        %v325 = vmax.bf16 %v261, %v293
        %v326 = vmax.bf16 %v262, %v294
        %v327 = vmax.bf16 %v263, %v295
        %v328 = vmax.bf16 %v312, %v313
        %v329 = vmax.bf16 %v314, %v315
        %v330 = vmax.bf16 %v316, %v317
        %v331 = vmax.bf16 %v318, %v319
        %v332 = vmax.bf16 %v320, %v321
        %v333 = vmax.bf16 %v322, %v323
        %v334 = vmax.bf16 %v324, %v325
        %v335 = vmax.bf16 %v326, %v327
        %336 = vst [vmem:[#allocation2] sm:$0xf] 0
        %337 = vst [vmem:[#allocation2 + $0x4] sm:$0x1] 0
        %s338 = scalar_lea.vmem [#allocation2], 72
        %339 = vst [vmem:[%s338] sm:$0xf] 0
        %340 = vst [vmem:[%s338 + $0x4] sm:$0x1] 0
        %v349 = vunpack.c.l.b16 %v328
        %v350 = vunpack.c.l.b16 %v329
        %v351 = vunpack.c.l.b16 %v330
        %v352 = vunpack.c.l.b16 %v331
        %v353 = vunpack.c.l.b16 %v332
        %v354 = vunpack.c.l.b16 %v333
        %v355 = vunpack.c.l.b16 %v334
        %v356 = vunpack.c.l.b16 %v335
        %v357 = vpack.c.b16 %v349, %v349
        %v358 = vpack.c.b16 %v350, %v350
        %v359 = vpack.c.b16 %v351, %v351
        %v360 = vpack.c.b16 %v352, %v352
        %v361 = vpack.c.b16 %v353, %v353
        %v362 = vpack.c.b16 %v354, %v354
        %v363 = vpack.c.b16 %v355, %v355
        %v364 = vpack.c.b16 %v356, %v356
        %v366 = vshrl.u32 %v357, 16
        %v368 = vrot.slane %v366, 7
        %v369 = vshll.u32 %v357, 16
        %v371 = vor.u32 %v368, %v369
        %v373 = vshrl.u32 %v358, 16
        %v375 = vrot.slane %v373, 7
        %v376 = vshll.u32 %v358, 16
        %v378 = vor.u32 %v375, %v376
        %v380 = vshrl.u32 %v359, 16
        %v382 = vrot.slane %v380, 7
        %v383 = vshll.u32 %v359, 16
        %v385 = vor.u32 %v382, %v383
        %v387 = vshrl.u32 %v360, 16
        %v389 = vrot.slane %v387, 7
        %v390 = vshll.u32 %v360, 16
        %v392 = vor.u32 %v389, %v390
        %v394 = vshrl.u32 %v361, 16
        %v396 = vrot.slane %v394, 7
        %v397 = vshll.u32 %v361, 16
        %v399 = vor.u32 %v396, %v397
        %v401 = vshrl.u32 %v362, 16
        %v403 = vrot.slane %v401, 7
        %v404 = vshll.u32 %v362, 16
        %v406 = vor.u32 %v403, %v404
        %v408 = vshrl.u32 %v363, 16
        %v410 = vrot.slane %v408, 7
        %v411 = vshll.u32 %v363, 16
        %v413 = vor.u32 %v410, %v411
        %v415 = vshrl.u32 %v364, 16
        %v417 = vrot.slane %v415, 7
        %v418 = vshll.u32 %v364, 16
        %v420 = vor.u32 %v417, %v418
        %vm429 = vcmask 1040384
        %vm430 = vsmask.f32 256
        %vm431 = vmand %vm429, %vm430
        %v432 = vsel %vm431, 0, %v371
        %v433 = vsel %vm431, 0, %v378
        %v434 = vsel %vm431, 0, %v385
        %v435 = vsel %vm431, 0, %v392
        %v436 = vsel %vm431, 0, %v399
        %v437 = vsel %vm431, 0, %v406
        %v438 = vsel %vm431, 0, %v413
        %v439 = vsel %vm431, 0, %v420
        %vm440 = vcmask 1044480
        %vm441 = vsmask.f32 4352
        %vm442 = vmand %vm440, %vm441
        %v443 = vsel %vm442, %v432, 0
        %v444 = vsel %vm442, %v433, 0
        %v445 = vsel %vm442, %v434, 0
        %v446 = vsel %vm442, %v435, 0
        %v447 = vsel %vm442, %v436, 0
        %v448 = vsel %vm442, %v437, 0
        %v449 = vsel %vm442, %v438, 0
        %v450 = vsel %vm442, %v439, 0
        %v459 = vunpack.c.l.b16 %v443
        %v460 = vunpack.c.h.b16 %v443
        %v461 = vunpack.c.l.b16 %v444
        %v462 = vunpack.c.h.b16 %v444
        %v463 = vunpack.c.l.b16 %v445
        %v464 = vunpack.c.h.b16 %v445
        %v465 = vunpack.c.l.b16 %v446
        %v466 = vunpack.c.h.b16 %v446
        %v467 = vunpack.c.l.b16 %v447
        %v468 = vunpack.c.h.b16 %v447
        %v469 = vunpack.c.l.b16 %v448
        %v470 = vunpack.c.h.b16 %v448
        %v471 = vunpack.c.l.b16 %v449
        %v472 = vunpack.c.h.b16 %v449
        %v473 = vunpack.c.l.b16 %v450
        %v474 = vunpack.c.h.b16 %v450
        %v475 = vpack.c.b16 %v459, %v459
        %v476 = vpack.c.b16 %v460, %v460
        %v477 = vpack.c.b16 %v461, %v461
        %v478 = vpack.c.b16 %v462, %v462
        %v479 = vpack.c.b16 %v463, %v463
        %v480 = vpack.c.b16 %v464, %v464
        %v481 = vpack.c.b16 %v465, %v465
        %v482 = vpack.c.b16 %v466, %v466
        %v483 = vpack.c.b16 %v467, %v467
        %v484 = vpack.c.b16 %v468, %v468
        %v485 = vpack.c.b16 %v469, %v469
        %v486 = vpack.c.b16 %v470, %v470
        %v487 = vpack.c.b16 %v471, %v471
        %v488 = vpack.c.b16 %v472, %v472
        %v489 = vpack.c.b16 %v473, %v473
        %v490 = vpack.c.b16 %v474, %v474
        %s507 = scalar_lea.vmem [#allocation2], 8
        %508 = vst [vmem:[%s507] sm:$0xf] %v475
        %509 = vst [vmem:[%s507 + $0x4] sm:$0x1] %v476
        %510 = vst [vmem:[%s507 + $0x8] sm:$0xf] %v477
        %511 = vst [vmem:[%s507 + $0xc] sm:$0x1] %v478
        %512 = vst [vmem:[%s507 + $0x10] sm:$0xf] %v479
        %513 = vst [vmem:[%s507 + $0x14] sm:$0x1] %v480
        %514 = vst [vmem:[%s507 + $0x18] sm:$0xf] %v481
        %515 = vst [vmem:[%s507 + $0x1c] sm:$0x1] %v482
        %516 = vst [vmem:[%s507 + $0x20] sm:$0xf] %v483
        %517 = vst [vmem:[%s507 + $0x24] sm:$0x1] %v484
        %518 = vst [vmem:[%s507 + $0x28] sm:$0xf] %v485
        %519 = vst [vmem:[%s507 + $0x2c] sm:$0x1] %v486
        %520 = vst [vmem:[%s507 + $0x30] sm:$0xf] %v487
        %521 = vst [vmem:[%s507 + $0x34] sm:$0x1] %v488
        %522 = vst [vmem:[%s507 + $0x38] sm:$0xf] %v489
        %523 = vst [vmem:[%s507 + $0x3c] sm:$0x1] %v490
        %v524 = vld [vmem:[#allocation2] sm:$0xf]
        %v525 = vld [vmem:[#allocation2 + $0x8] sm:$0xf]
        %v526 = vld [vmem:[#allocation2 + $0x10] sm:$0xf]
        %v527 = vld [vmem:[#allocation2 + $0x18] sm:$0xf]
        %v528 = vld [vmem:[#allocation2 + $0x20] sm:$0xf]
        %v529 = vld [vmem:[#allocation2 + $0x28] sm:$0xf]
        %v530 = vld [vmem:[#allocation2 + $0x30] sm:$0xf]
        %v531 = vld [vmem:[#allocation2 + $0x38] sm:$0xf]
        %v532 = vld [vmem:[#allocation6] sm:$0xf]
        %v533 = vld [vmem:[#allocation6 + $0x4] sm:$0xf]
        %v534 = vld [vmem:[#allocation6 + $0x8] sm:$0xf]
        %v535 = vld [vmem:[#allocation6 + $0xc] sm:$0xf]
        %v536 = vld [vmem:[#allocation6 + $0x10] sm:$0xf]
        %v537 = vld [vmem:[#allocation6 + $0x14] sm:$0xf]
        %v538 = vld [vmem:[#allocation6 + $0x18] sm:$0xf]
        %v539 = vld [vmem:[#allocation6 + $0x1c] sm:$0xf]
        %v540 = vld [vmem:[#allocation6 + $0x20] sm:$0xf]
        %v541 = vld [vmem:[#allocation6 + $0x24] sm:$0xf]
        %v542 = vld [vmem:[#allocation6 + $0x28] sm:$0xf]
        %v543 = vld [vmem:[#allocation6 + $0x2c] sm:$0xf]
        %v544 = vld [vmem:[#allocation6 + $0x30] sm:$0xf]
        %v545 = vld [vmem:[#allocation6 + $0x34] sm:$0xf]
        %v546 = vld [vmem:[#allocation6 + $0x38] sm:$0xf]
        %v547 = vld [vmem:[#allocation6 + $0x3c] sm:$0xf]
        %v548 = vld [vmem:[#allocation2 + $0x4] sm:$0x1]
        %v549 = vld [vmem:[#allocation2 + $0xc] sm:$0x1]
        %v550 = vld [vmem:[#allocation2 + $0x14] sm:$0x1]
        %v551 = vld [vmem:[#allocation2 + $0x1c] sm:$0x1]
        %v552 = vld [vmem:[#allocation2 + $0x24] sm:$0x1]
        %v553 = vld [vmem:[#allocation2 + $0x2c] sm:$0x1]
        %v554 = vld [vmem:[#allocation2 + $0x34] sm:$0x1]
        %v555 = vld [vmem:[#allocation2 + $0x3c] sm:$0x1]
        %vm556 = vsmask.f32 3328
        %vm557 = vsmask.f32 7440
        %vm558 = vmor %vm556, %vm557
        %v560 = vshrl.u32 %v524, 16
        %v562 = vrot.slane %v560, 4
        %v563 = vshll.u32 %v524, 16
        %v565 = vrot.slane %v563, 5
        %v566 = vor.u32 %v562, %v565
        %v567 = vrot.slane %v566, 4
        %v569 = vshll.u32 %v548, 16
        %v571 = vrot.slane %v569, 5
        %v572 = vsel %vm558, %v567, %v571
        %v574 = vshrl.u32 %v525, 16
        %v576 = vrot.slane %v574, 4
        %v577 = vshll.u32 %v525, 16
        %v579 = vrot.slane %v577, 5
        %v580 = vor.u32 %v576, %v579
        %v581 = vrot.slane %v580, 4
        %v583 = vshll.u32 %v549, 16
        %v585 = vrot.slane %v583, 5
        %v586 = vsel %vm558, %v581, %v585
        %v588 = vshrl.u32 %v526, 16
        %v590 = vrot.slane %v588, 4
        %v591 = vshll.u32 %v526, 16
        %v593 = vrot.slane %v591, 5
        %v594 = vor.u32 %v590, %v593
        %v595 = vrot.slane %v594, 4
        %v597 = vshll.u32 %v550, 16
        %v599 = vrot.slane %v597, 5
        %v600 = vsel %vm558, %v595, %v599
        %v602 = vshrl.u32 %v527, 16
        %v604 = vrot.slane %v602, 4
        %v605 = vshll.u32 %v527, 16
        %v607 = vrot.slane %v605, 5
        %v608 = vor.u32 %v604, %v607
        %v609 = vrot.slane %v608, 4
        %v611 = vshll.u32 %v551, 16
        %v613 = vrot.slane %v611, 5
        %v614 = vsel %vm558, %v609, %v613
        %v616 = vshrl.u32 %v528, 16
        %v618 = vrot.slane %v616, 4
        %v619 = vshll.u32 %v528, 16
        %v621 = vrot.slane %v619, 5
        %v622 = vor.u32 %v618, %v621
        %v623 = vrot.slane %v622, 4
        %v625 = vshll.u32 %v552, 16
        %v627 = vrot.slane %v625, 5
        %v628 = vsel %vm558, %v623, %v627
        %v630 = vshrl.u32 %v529, 16
        %v632 = vrot.slane %v630, 4
        %v633 = vshll.u32 %v529, 16
        %v635 = vrot.slane %v633, 5
        %v636 = vor.u32 %v632, %v635
        %v637 = vrot.slane %v636, 4
        %v639 = vshll.u32 %v553, 16
        %v641 = vrot.slane %v639, 5
        %v642 = vsel %vm558, %v637, %v641
        %v644 = vshrl.u32 %v530, 16
        %v646 = vrot.slane %v644, 4
        %v647 = vshll.u32 %v530, 16
        %v649 = vrot.slane %v647, 5
        %v650 = vor.u32 %v646, %v649
        %v651 = vrot.slane %v650, 4
        %v653 = vshll.u32 %v554, 16
        %v655 = vrot.slane %v653, 5
        %v656 = vsel %vm558, %v651, %v655
        %v658 = vshrl.u32 %v531, 16
        %v660 = vrot.slane %v658, 4
        %v661 = vshll.u32 %v531, 16
        %v663 = vrot.slane %v661, 5
        %v664 = vor.u32 %v660, %v663
        %v665 = vrot.slane %v664, 4
        %v667 = vshll.u32 %v555, 16
        %v669 = vrot.slane %v667, 5
        %v670 = vsel %vm558, %v665, %v669
        %s671 = scalar_lea.vmem [#allocation6], 64
        %v672 = vld [vmem:[%s671] sm:$0xf]
        %v673 = vld [vmem:[%s671 + $0x4] sm:$0xf]
        %v674 = vld [vmem:[%s671 + $0x8] sm:$0xf]
        %v675 = vld [vmem:[%s671 + $0xc] sm:$0xf]
        %v676 = vld [vmem:[%s671 + $0x10] sm:$0xf]
        %v677 = vld [vmem:[%s671 + $0x14] sm:$0xf]
        %v678 = vld [vmem:[%s671 + $0x18] sm:$0xf]
        %v679 = vld [vmem:[%s671 + $0x1c] sm:$0xf]
        %v680 = vld [vmem:[%s671 + $0x20] sm:$0xf]
        %v681 = vld [vmem:[%s671 + $0x24] sm:$0xf]
        %v682 = vld [vmem:[%s671 + $0x28] sm:$0xf]
        %v683 = vld [vmem:[%s671 + $0x2c] sm:$0xf]
        %v684 = vld [vmem:[%s671 + $0x30] sm:$0xf]
        %v685 = vld [vmem:[%s671 + $0x34] sm:$0xf]
        %v686 = vld [vmem:[%s671 + $0x38] sm:$0xf]
        %v687 = vld [vmem:[%s671 + $0x3c] sm:$0xf]
        %v688 = vunpack.c.l.b16 %v572
        %v689 = vunpack.c.l.b16 %v586
        %v690 = vunpack.c.l.b16 %v600
        %v691 = vunpack.c.l.b16 %v614
        %v692 = vunpack.c.l.b16 %v628
        %v693 = vunpack.c.l.b16 %v642
        %v694 = vunpack.c.l.b16 %v656
        %v695 = vunpack.c.l.b16 %v670
        %v696 = vpack.c.b16 %v689, %v688
        %v697 = vpack.c.b16 %v691, %v690
        %v698 = vpack.c.b16 %v693, %v692
        %v699 = vpack.c.b16 %v695, %v694
        %v720 = vunpack.c.l.b16 %v672
        %v721 = vunpack.c.l.b16 %v673
        %v722 = vunpack.c.l.b16 %v674
        %v723 = vunpack.c.l.b16 %v675
        %v724 = vunpack.c.l.b16 %v676
        %v725 = vunpack.c.l.b16 %v677
        %v726 = vunpack.c.l.b16 %v678
        %v727 = vunpack.c.l.b16 %v679
        %v728 = vunpack.c.l.b16 %v680
        %v729 = vunpack.c.l.b16 %v681
        %v730 = vunpack.c.l.b16 %v682
        %v731 = vunpack.c.l.b16 %v683
        %v732 = vunpack.c.l.b16 %v684
        %v733 = vunpack.c.l.b16 %v685
        %v734 = vunpack.c.l.b16 %v686
        %v735 = vunpack.c.l.b16 %v687
        %v736 = vpack.c.b16 %v721, %v720
        %v737 = vpack.c.b16 %v723, %v722
        %v738 = vpack.c.b16 %v725, %v724
        %v739 = vpack.c.b16 %v727, %v726
        %v740 = vpack.c.b16 %v729, %v728
        %v741 = vpack.c.b16 %v731, %v730
        %v742 = vpack.c.b16 %v733, %v732
        %v743 = vpack.c.b16 %v735, %v734
        %752 = vmatprep.subr.bf16.mxu0 0
        %753 = vmatpush1.bf16.msra.mxu0 %v736
        %754 = vmatprep.subr.bf16.mxu0 0
        %755 = vmatpush1.bf16.msra.mxu0 %v737
        %756 = vmatprep.subr.bf16.mxu0 0
        %757 = vmatpush1.bf16.msra.mxu0 %v738
        %758 = vmatprep.subr.bf16.mxu0 0
        %759 = vmatpush1.bf16.msra.mxu0 %v739
        %760 = vmatprep.subr.bf16.mxu0 0
        %761 = vmatpush1.bf16.msra.mxu0 %v740
        %762 = vmatprep.subr.bf16.mxu0 0
        %763 = vmatpush1.bf16.msra.mxu0 %v741
        %764 = vmatprep.subr.bf16.mxu0 0
        %765 = vmatpush1.bf16.msra.mxu0 %v742
        %766 = vmatprep.subr.bf16.mxu0 0
        %767 = vmatpush1.bf16.msra.mxu0 %v743
        %768 = vmatprep.subr.bf16.mxu0 0
        %769 = vmatpush1.bf16.msra.mxu0 0
        %770 = vmatprep.subr.bf16.mxu0 0
        %771 = vmatpush1.bf16.msra.mxu0 0
        %772 = vmatprep.subr.bf16.mxu0 0
        %773 = vmatpush1.bf16.msra.mxu0 0
        %774 = vmatprep.subr.bf16.mxu0 0
        %775 = vmatpush1.bf16.msra.mxu0 0
        %776 = vmatprep.subr.bf16.mxu0 0
        %777 = vmatpush1.bf16.msra.mxu0 0
        %778 = vmatprep.subr.bf16.mxu0 0
        %779 = vmatpush1.bf16.msra.mxu0 0
        %780 = vmatprep.subr.bf16.mxu0 0
        %781 = vmatpush1.bf16.msra.mxu0 0
        %782 = vmatprep.subr.bf16.mxu0 0
        %783 = vmatpush1.bf16.msra.mxu0 0
        %784 = vmatprep.mubr.bf16.mxu0 0
        %785 = vmatmul.mubr.bf16.gmra.mrb[0].mxu0 %v696
        %v786 = vpop.f32.mrb[0].mxu0
        %v787 = vadd.f32 0.0, %v786
        %v788 = vpop.f32.mrb[0].mxu0
        %v789 = vpop.f32.mrb[0].mxu0
        %v790 = vadd.f32 0.0, %v789
        %v791 = vpop.f32.mrb[0].mxu0
        %792 = vmatprep.mubr.bf16.mxu0 0
        %793 = vmatmul.mubr.bf16.gmra.mrb[0].mxu0 %v697
        %v794 = vpop.f32.mrb[0].mxu0
        %v795 = vadd.f32 0.0, %v794
        %v796 = vpop.f32.mrb[0].mxu0
        %v797 = vpop.f32.mrb[0].mxu0
        %v798 = vadd.f32 0.0, %v797
        %v799 = vpop.f32.mrb[0].mxu0
        %800 = vmatprep.mubr.bf16.mxu0 0
        %801 = vmatmul.mubr.bf16.gmra.mrb[0].mxu0 %v698
        %v802 = vpop.f32.mrb[0].mxu0
        %v803 = vadd.f32 0.0, %v802
        %v804 = vpop.f32.mrb[0].mxu0
        %v805 = vpop.f32.mrb[0].mxu0
        %v806 = vadd.f32 0.0, %v805
        %v807 = vpop.f32.mrb[0].mxu0
        %808 = vmatprep.mubr.bf16.mxu0 0
        %809 = vmatmul.mubr.bf16.gmra.mrb[0].mxu0 %v699
        %v810 = vpop.f32.mrb[0].mxu0
        %v811 = vadd.f32 0.0, %v810
        %v812 = vpop.f32.mrb[0].mxu0
        %v813 = vpop.f32.mrb[0].mxu0
        %v814 = vadd.f32 0.0, %v813
        %v815 = vpop.f32.mrb[0].mxu0
        %816 = vdwg.mxu0
        %v825 = vunpack.c.l.b16 %v524
        %v826 = vunpack.c.l.b16 %v525
        %v827 = vunpack.c.l.b16 %v526
        %v828 = vunpack.c.l.b16 %v527
        %v829 = vunpack.c.l.b16 %v528
        %v830 = vunpack.c.l.b16 %v529
        %v831 = vunpack.c.l.b16 %v530
        %v832 = vunpack.c.l.b16 %v531
        %v833 = vpack.c.b16 %v826, %v825
        %v834 = vpack.c.b16 %v828, %v827
        %v835 = vpack.c.b16 %v830, %v829
        %v836 = vpack.c.b16 %v832, %v831
        %v857 = vunpack.c.l.b16 %v532
        %v858 = vunpack.c.l.b16 %v533
        %v859 = vunpack.c.l.b16 %v534
        %v860 = vunpack.c.l.b16 %v535
        %v861 = vunpack.c.l.b16 %v536
        %v862 = vunpack.c.l.b16 %v537
        %v863 = vunpack.c.l.b16 %v538
        %v864 = vunpack.c.l.b16 %v539
        %v865 = vunpack.c.l.b16 %v540
        %v866 = vunpack.c.l.b16 %v541
        %v867 = vunpack.c.l.b16 %v542
        %v868 = vunpack.c.l.b16 %v543
        %v869 = vunpack.c.l.b16 %v544
        %v870 = vunpack.c.l.b16 %v545
        %v871 = vunpack.c.l.b16 %v546
        %v872 = vunpack.c.l.b16 %v547
        %v873 = vpack.c.b16 %v858, %v857
        %v874 = vpack.c.b16 %v860, %v859
        %v875 = vpack.c.b16 %v862, %v861
        %v876 = vpack.c.b16 %v864, %v863
        %v877 = vpack.c.b16 %v866, %v865
        %v878 = vpack.c.b16 %v868, %v867
        %v879 = vpack.c.b16 %v870, %v869
        %v880 = vpack.c.b16 %v872, %v871
        %889 = vmatprep.subr.bf16.mxu0 0
        %890 = vmatpush1.bf16.msra.mxu0 %v873
        %891 = vmatprep.subr.bf16.mxu0 0
        %892 = vmatpush1.bf16.msra.mxu0 %v874
        %893 = vmatprep.subr.bf16.mxu0 0
        %894 = vmatpush1.bf16.msra.mxu0 %v875
        %895 = vmatprep.subr.bf16.mxu0 0
        %896 = vmatpush1.bf16.msra.mxu0 %v876
        %897 = vmatprep.subr.bf16.mxu0 0
        %898 = vmatpush1.bf16.msra.mxu0 %v877
        %899 = vmatprep.subr.bf16.mxu0 0
        %900 = vmatpush1.bf16.msra.mxu0 %v878
        %901 = vmatprep.subr.bf16.mxu0 0
        %902 = vmatpush1.bf16.msra.mxu0 %v879
        %903 = vmatprep.subr.bf16.mxu0 0
        %904 = vmatpush1.bf16.msra.mxu0 %v880
        %905 = vmatprep.subr.bf16.mxu0 0
        %906 = vmatpush1.bf16.msra.mxu0 0
        %907 = vmatprep.subr.bf16.mxu0 0
        %908 = vmatpush1.bf16.msra.mxu0 0
        %909 = vmatprep.subr.bf16.mxu0 0
        %910 = vmatpush1.bf16.msra.mxu0 0
        %911 = vmatprep.subr.bf16.mxu0 0
        %912 = vmatpush1.bf16.msra.mxu0 0
        %913 = vmatprep.subr.bf16.mxu0 0
        %914 = vmatpush1.bf16.msra.mxu0 0
        %915 = vmatprep.subr.bf16.mxu0 0
        %916 = vmatpush1.bf16.msra.mxu0 0
        %917 = vmatprep.subr.bf16.mxu0 0
        %918 = vmatpush1.bf16.msra.mxu0 0
        %919 = vmatprep.subr.bf16.mxu0 0
        %920 = vmatpush1.bf16.msra.mxu0 0
        %921 = vmatprep.mubr.bf16.mxu0 0
        %922 = vmatmul.mubr.bf16.gmra.mrb[0].mxu0 %v833
        %v923 = vpop.f32.mrb[0].mxu0
        %v924 = vadd.f32 %v787, %v923
        %v925 = vpop.f32.mrb[0].mxu0
        %v926 = vpop.f32.mrb[0].mxu0
        %v927 = vadd.f32 %v790, %v926
        %v928 = vpop.f32.mrb[0].mxu0
        %929 = vmatprep.mubr.bf16.mxu0 0
        %930 = vmatmul.mubr.bf16.gmra.mrb[0].mxu0 %v834
        %v931 = vpop.f32.mrb[0].mxu0
        %v932 = vadd.f32 %v795, %v931
        %v933 = vpop.f32.mrb[0].mxu0
        %v934 = vpop.f32.mrb[0].mxu0
        %v935 = vadd.f32 %v798, %v934
        %v936 = vpop.f32.mrb[0].mxu0
        %937 = vmatprep.mubr.bf16.mxu0 0
        %938 = vmatmul.mubr.bf16.gmra.mrb[0].mxu0 %v835
        %v939 = vpop.f32.mrb[0].mxu0
        %v940 = vadd.f32 %v803, %v939
        %v941 = vpop.f32.mrb[0].mxu0
        %v942 = vpop.f32.mrb[0].mxu0
        %v943 = vadd.f32 %v806, %v942
        %v944 = vpop.f32.mrb[0].mxu0
        %945 = vmatprep.mubr.bf16.mxu0 0
        %946 = vmatmul.mubr.bf16.gmra.mrb[0].mxu0 %v836
        %v947 = vpop.f32.mrb[0].mxu0
        %v948 = vadd.f32 %v811, %v947
        %v949 = vpop.f32.mrb[0].mxu0
        %v950 = vpop.f32.mrb[0].mxu0
        %v951 = vadd.f32 %v814, %v950
        %v952 = vpop.f32.mrb[0].mxu0
        %953 = vdwg.mxu0
        %v954 = vld [vmem:[#allocation2] sm:$0xe]
        %v955 = vld [vmem:[#allocation2 + $0x8] sm:$0xe]
        %v956 = vld [vmem:[#allocation2 + $0x10] sm:$0xe]
        %v957 = vld [vmem:[#allocation2 + $0x18] sm:$0xe]
        %v958 = vld [vmem:[#allocation2 + $0x20] sm:$0xe]
        %v959 = vld [vmem:[#allocation2 + $0x28] sm:$0xe]
        %v960 = vld [vmem:[#allocation2 + $0x30] sm:$0xe]
        %v961 = vld [vmem:[#allocation2 + $0x38] sm:$0xe]
        %vm978 = vcmask 1042432
        %vm979 = vcmask 1046532
        %vm980 = vmor %vm978, %vm979
        %v981 = vrot.slane %v954, 5
        %v982 = vrot.slane %v981, 4
        %v983 = vrot.slane %v548, 5
        %v984 = vsel %vm980, %v982, %v983
        %v985 = vrot.slane %v955, 5
        %v986 = vrot.slane %v985, 4
        %v987 = vrot.slane %v549, 5
        %v988 = vsel %vm980, %v986, %v987
        %v989 = vrot.slane %v956, 5
        %v990 = vrot.slane %v989, 4
        %v991 = vrot.slane %v550, 5
        %v992 = vsel %vm980, %v990, %v991
        %v993 = vrot.slane %v957, 5
        %v994 = vrot.slane %v993, 4
        %v995 = vrot.slane %v551, 5
        %v996 = vsel %vm980, %v994, %v995
        %v997 = vrot.slane %v958, 5
        %v998 = vrot.slane %v997, 4
        %v999 = vrot.slane %v552, 5
        %v1000 = vsel %vm980, %v998, %v999
        %v1001 = vrot.slane %v959, 5
        %v1002 = vrot.slane %v1001, 4
        %v1003 = vrot.slane %v553, 5
        %v1004 = vsel %vm980, %v1002, %v1003
        %v1005 = vrot.slane %v960, 5
        %v1006 = vrot.slane %v1005, 4
        %v1007 = vrot.slane %v554, 5
        %v1008 = vsel %vm980, %v1006, %v1007
        %v1009 = vrot.slane %v961, 5
        %v1010 = vrot.slane %v1009, 4
        %v1011 = vrot.slane %v555, 5
        %v1012 = vsel %vm980, %v1010, %v1011
        %s1013 = scalar_lea.vmem [#allocation6], 128
        %v1014 = vld [vmem:[%s1013] sm:$0xf]
        %v1015 = vld [vmem:[%s1013 + $0x4] sm:$0xf]
        %v1016 = vld [vmem:[%s1013 + $0x8] sm:$0xf]
        %v1017 = vld [vmem:[%s1013 + $0xc] sm:$0xf]
        %v1018 = vld [vmem:[%s1013 + $0x10] sm:$0xf]
        %v1019 = vld [vmem:[%s1013 + $0x14] sm:$0xf]
        %v1020 = vld [vmem:[%s1013 + $0x18] sm:$0xf]
        %v1021 = vld [vmem:[%s1013 + $0x1c] sm:$0xf]
        %v1022 = vld [vmem:[%s1013 + $0x20] sm:$0xf]
        %v1023 = vld [vmem:[%s1013 + $0x24] sm:$0xf]
        %v1024 = vld [vmem:[%s1013 + $0x28] sm:$0xf]
        %v1025 = vld [vmem:[%s1013 + $0x2c] sm:$0xf]
        %v1026 = vld [vmem:[%s1013 + $0x30] sm:$0xf]
        %v1027 = vld [vmem:[%s1013 + $0x34] sm:$0xf]
        %v1028 = vld [vmem:[%s1013 + $0x38] sm:$0xf]
        %v1029 = vld [vmem:[%s1013 + $0x3c] sm:$0xf]
        %v1030 = vunpack.c.l.b16 %v984
        %v1031 = vunpack.c.l.b16 %v988
        %v1032 = vunpack.c.l.b16 %v992
        %v1033 = vunpack.c.l.b16 %v996
        %v1034 = vunpack.c.l.b16 %v1000
        %v1035 = vunpack.c.l.b16 %v1004
        %v1036 = vunpack.c.l.b16 %v1008
        %v1037 = vunpack.c.l.b16 %v1012
        %v1038 = vpack.c.b16 %v1031, %v1030
        %v1039 = vpack.c.b16 %v1033, %v1032
        %v1040 = vpack.c.b16 %v1035, %v1034
        %v1041 = vpack.c.b16 %v1037, %v1036
        %v1062 = vunpack.c.l.b16 %v1014
        %v1063 = vunpack.c.l.b16 %v1015
        %v1064 = vunpack.c.l.b16 %v1016
        %v1065 = vunpack.c.l.b16 %v1017
        %v1066 = vunpack.c.l.b16 %v1018
        %v1067 = vunpack.c.l.b16 %v1019
        %v1068 = vunpack.c.l.b16 %v1020
        %v1069 = vunpack.c.l.b16 %v1021
        %v1070 = vunpack.c.l.b16 %v1022
        %v1071 = vunpack.c.l.b16 %v1023
        %v1072 = vunpack.c.l.b16 %v1024
        %v1073 = vunpack.c.l.b16 %v1025
        %v1074 = vunpack.c.l.b16 %v1026
        %v1075 = vunpack.c.l.b16 %v1027
        %v1076 = vunpack.c.l.b16 %v1028
        %v1077 = vunpack.c.l.b16 %v1029
        %v1078 = vpack.c.b16 %v1063, %v1062
        %v1079 = vpack.c.b16 %v1065, %v1064
        %v1080 = vpack.c.b16 %v1067, %v1066
        %v1081 = vpack.c.b16 %v1069, %v1068
        %v1082 = vpack.c.b16 %v1071, %v1070
        %v1083 = vpack.c.b16 %v1073, %v1072
        %v1084 = vpack.c.b16 %v1075, %v1074
        %v1085 = vpack.c.b16 %v1077, %v1076
        %1094 = vmatprep.subr.bf16.mxu0 0
        %1095 = vmatpush1.bf16.msra.mxu0 %v1078
        %1096 = vmatprep.subr.bf16.mxu0 0
        %1097 = vmatpush1.bf16.msra.mxu0 %v1079
        %1098 = vmatprep.subr.bf16.mxu0 0
        %1099 = vmatpush1.bf16.msra.mxu0 %v1080
        %1100 = vmatprep.subr.bf16.mxu0 0
        %1101 = vmatpush1.bf16.msra.mxu0 %v1081
        %1102 = vmatprep.subr.bf16.mxu0 0
        %1103 = vmatpush1.bf16.msra.mxu0 %v1082
        %1104 = vmatprep.subr.bf16.mxu0 0
        %1105 = vmatpush1.bf16.msra.mxu0 %v1083
        %1106 = vmatprep.subr.bf16.mxu0 0
        %1107 = vmatpush1.bf16.msra.mxu0 %v1084
        %1108 = vmatprep.subr.bf16.mxu0 0
        %1109 = vmatpush1.bf16.msra.mxu0 %v1085
        %1110 = vmatprep.subr.bf16.mxu0 0
        %1111 = vmatpush1.bf16.msra.mxu0 0
        %1112 = vmatprep.subr.bf16.mxu0 0
        %1113 = vmatpush1.bf16.msra.mxu0 0
        %1114 = vmatprep.subr.bf16.mxu0 0
        %1115 = vmatpush1.bf16.msra.mxu0 0
        %1116 = vmatprep.subr.bf16.mxu0 0
        %1117 = vmatpush1.bf16.msra.mxu0 0
        %1118 = vmatprep.subr.bf16.mxu0 0
        %1119 = vmatpush1.bf16.msra.mxu0 0
        %1120 = vmatprep.subr.bf16.mxu0 0
        %1121 = vmatpush1.bf16.msra.mxu0 0
        %1122 = vmatprep.subr.bf16.mxu0 0
        %1123 = vmatpush1.bf16.msra.mxu0 0
        %1124 = vmatprep.subr.bf16.mxu0 0
        %1125 = vmatpush1.bf16.msra.mxu0 0
        %1126 = vmatprep.mubr.bf16.mxu0 0
        %1127 = vmatmul.mubr.bf16.gmra.mrb[0].mxu0 %v1038
        %v1128 = vpop.f32.mrb[0].mxu0
        %v1129 = vadd.f32 0.0, %v1128
        %v1130 = vpop.f32.mrb[0].mxu0
        %v1131 = vpop.f32.mrb[0].mxu0
        %v1132 = vadd.f32 0.0, %v1131
        %v1133 = vpop.f32.mrb[0].mxu0
        %1134 = vmatprep.mubr.bf16.mxu0 0
        %1135 = vmatmul.mubr.bf16.gmra.mrb[0].mxu0 %v1039
        %v1136 = vpop.f32.mrb[0].mxu0
        %v1137 = vadd.f32 0.0, %v1136
        %v1138 = vpop.f32.mrb[0].mxu0
        %v1139 = vpop.f32.mrb[0].mxu0
        %v1140 = vadd.f32 0.0, %v1139
        %v1141 = vpop.f32.mrb[0].mxu0
        %1142 = vmatprep.mubr.bf16.mxu0 0
        %1143 = vmatmul.mubr.bf16.gmra.mrb[0].mxu0 %v1040
        %v1144 = vpop.f32.mrb[0].mxu0
        %v1145 = vadd.f32 0.0, %v1144
        %v1146 = vpop.f32.mrb[0].mxu0
        %v1147 = vpop.f32.mrb[0].mxu0
        %v1148 = vadd.f32 0.0, %v1147
        %v1149 = vpop.f32.mrb[0].mxu0
        %1150 = vmatprep.mubr.bf16.mxu0 0
        %1151 = vmatmul.mubr.bf16.gmra.mrb[0].mxu0 %v1041
        %v1152 = vpop.f32.mrb[0].mxu0
        %v1153 = vadd.f32 0.0, %v1152
        %v1154 = vpop.f32.mrb[0].mxu0
        %v1155 = vpop.f32.mrb[0].mxu0
        %v1156 = vadd.f32 0.0, %v1155
        %v1157 = vpop.f32.mrb[0].mxu0
        %1158 = vdwg.mxu0
        %v1159 = vadd.f32 %v924, %v1129
        %v1160 = vadd.f32 %v927, %v1132
        %v1161 = vadd.f32 %v932, %v1137
        %v1162 = vadd.f32 %v935, %v1140
        %v1163 = vadd.f32 %v940, %v1145
        %v1164 = vadd.f32 %v943, %v1148
        %v1165 = vadd.f32 %v948, %v1153
        %v1166 = vadd.f32 %v951, %v1156
        %v1167 = vld [vmem:[%s507] sm:$0xf]
        %v1168 = vld [vmem:[%s507 + $0x8] sm:$0xf]
        %v1169 = vld [vmem:[%s507 + $0x10] sm:$0xf]
        %v1170 = vld [vmem:[%s507 + $0x18] sm:$0xf]
        %v1171 = vld [vmem:[%s507 + $0x20] sm:$0xf]
        %v1172 = vld [vmem:[%s507 + $0x28] sm:$0xf]
        %v1173 = vld [vmem:[%s507 + $0x30] sm:$0xf]
        %v1174 = vld [vmem:[%s507 + $0x38] sm:$0xf]
        %s1175 = scalar_lea.vmem [#allocation6], 192
        %v1176 = vld [vmem:[%s1175] sm:$0xf]
        %v1177 = vld [vmem:[%s1175 + $0x4] sm:$0xf]
        %v1178 = vld [vmem:[%s1175 + $0x8] sm:$0xf]
        %v1179 = vld [vmem:[%s1175 + $0xc] sm:$0xf]
        %v1180 = vld [vmem:[%s1175 + $0x10] sm:$0xf]
        %v1181 = vld [vmem:[%s1175 + $0x14] sm:$0xf]
        %v1182 = vld [vmem:[%s1175 + $0x18] sm:$0xf]
        %v1183 = vld [vmem:[%s1175 + $0x1c] sm:$0xf]
        %v1184 = vld [vmem:[%s1175 + $0x20] sm:$0xf]
        %v1185 = vld [vmem:[%s1175 + $0x24] sm:$0xf]
        %v1186 = vld [vmem:[%s1175 + $0x28] sm:$0xf]
        %v1187 = vld [vmem:[%s1175 + $0x2c] sm:$0xf]
        %v1188 = vld [vmem:[%s1175 + $0x30] sm:$0xf]
        %v1189 = vld [vmem:[%s1175 + $0x34] sm:$0xf]
        %v1190 = vld [vmem:[%s1175 + $0x38] sm:$0xf]
        %v1191 = vld [vmem:[%s1175 + $0x3c] sm:$0xf]
        %v1200 = vunpack.c.l.b16 %v1167
        %v1201 = vunpack.c.l.b16 %v1168
        %v1202 = vunpack.c.l.b16 %v1169
        %v1203 = vunpack.c.l.b16 %v1170
        %v1204 = vunpack.c.l.b16 %v1171
        %v1205 = vunpack.c.l.b16 %v1172
        %v1206 = vunpack.c.l.b16 %v1173
        %v1207 = vunpack.c.l.b16 %v1174
        %v1208 = vpack.c.b16 %v1201, %v1200
        %v1209 = vpack.c.b16 %v1203, %v1202
        %v1210 = vpack.c.b16 %v1205, %v1204
        %v1211 = vpack.c.b16 %v1207, %v1206
        %v1232 = vunpack.c.l.b16 %v1176
        %v1233 = vunpack.c.l.b16 %v1177
        %v1234 = vunpack.c.l.b16 %v1178
        %v1235 = vunpack.c.l.b16 %v1179
        %v1236 = vunpack.c.l.b16 %v1180
        %v1237 = vunpack.c.l.b16 %v1181
        %v1238 = vunpack.c.l.b16 %v1182
        %v1239 = vunpack.c.l.b16 %v1183
        %v1240 = vunpack.c.l.b16 %v1184
        %v1241 = vunpack.c.l.b16 %v1185
        %v1242 = vunpack.c.l.b16 %v1186
        %v1243 = vunpack.c.l.b16 %v1187
        %v1244 = vunpack.c.l.b16 %v1188
        %v1245 = vunpack.c.l.b16 %v1189
        %v1246 = vunpack.c.l.b16 %v1190
        %v1247 = vunpack.c.l.b16 %v1191
        %v1248 = vpack.c.b16 %v1233, %v1232
        %v1249 = vpack.c.b16 %v1235, %v1234
        %v1250 = vpack.c.b16 %v1237, %v1236
        %v1251 = vpack.c.b16 %v1239, %v1238
        %v1252 = vpack.c.b16 %v1241, %v1240
        %v1253 = vpack.c.b16 %v1243, %v1242
        %v1254 = vpack.c.b16 %v1245, %v1244
        %v1255 = vpack.c.b16 %v1247, %v1246
        %1264 = vmatprep.subr.bf16.mxu0 0
        %1265 = vmatpush1.bf16.msra.mxu0 %v1248
        %1266 = vmatprep.subr.bf16.mxu0 0
        %1267 = vmatpush1.bf16.msra.mxu0 %v1249
        %1268 = vmatprep.subr.bf16.mxu0 0
        %1269 = vmatpush1.bf16.msra.mxu0 %v1250
        %1270 = vmatprep.subr.bf16.mxu0 0
        %1271 = vmatpush1.bf16.msra.mxu0 %v1251
        %1272 = vmatprep.subr.bf16.mxu0 0
        %1273 = vmatpush1.bf16.msra.mxu0 %v1252
        %1274 = vmatprep.subr.bf16.mxu0 0
        %1275 = vmatpush1.bf16.msra.mxu0 %v1253
        %1276 = vmatprep.subr.bf16.mxu0 0
        %1277 = vmatpush1.bf16.msra.mxu0 %v1254
        %1278 = vmatprep.subr.bf16.mxu0 0
        %1279 = vmatpush1.bf16.msra.mxu0 %v1255
        %1280 = vmatprep.subr.bf16.mxu0 0
        %1281 = vmatpush1.bf16.msra.mxu0 0
        %1282 = vmatprep.subr.bf16.mxu0 0
        %1283 = vmatpush1.bf16.msra.mxu0 0
        %1284 = vmatprep.subr.bf16.mxu0 0
        %1285 = vmatpush1.bf16.msra.mxu0 0
        %1286 = vmatprep.subr.bf16.mxu0 0
        %1287 = vmatpush1.bf16.msra.mxu0 0
        %1288 = vmatprep.subr.bf16.mxu0 0
        %1289 = vmatpush1.bf16.msra.mxu0 0
        %1290 = vmatprep.subr.bf16.mxu0 0
        %1291 = vmatpush1.bf16.msra.mxu0 0
        %1292 = vmatprep.subr.bf16.mxu0 0
        %1293 = vmatpush1.bf16.msra.mxu0 0
        %1294 = vmatprep.subr.bf16.mxu0 0
        %1295 = vmatpush1.bf16.msra.mxu0 0
        %1296 = vmatprep.mubr.bf16.mxu0 0
        %1297 = vmatmul.mubr.bf16.gmra.mrb[0].mxu0 %v1208
        %v1298 = vpop.f32.mrb[0].mxu0
        %v1299 = vadd.f32 0.0, %v1298
        %v1300 = vpop.f32.mrb[0].mxu0
        %v1301 = vpop.f32.mrb[0].mxu0
        %v1302 = vadd.f32 0.0, %v1301
        %v1303 = vpop.f32.mrb[0].mxu0
        %1304 = vmatprep.mubr.bf16.mxu0 0
        %1305 = vmatmul.mubr.bf16.gmra.mrb[0].mxu0 %v1209
        %v1306 = vpop.f32.mrb[0].mxu0
        %v1307 = vadd.f32 0.0, %v1306
        %v1308 = vpop.f32.mrb[0].mxu0
        %v1309 = vpop.f32.mrb[0].mxu0
        %v1310 = vadd.f32 0.0, %v1309
        %v1311 = vpop.f32.mrb[0].mxu0
        %1312 = vmatprep.mubr.bf16.mxu0 0
        %1313 = vmatmul.mubr.bf16.gmra.mrb[0].mxu0 %v1210
        %v1314 = vpop.f32.mrb[0].mxu0
        %v1315 = vadd.f32 0.0, %v1314
        %v1316 = vpop.f32.mrb[0].mxu0
        %v1317 = vpop.f32.mrb[0].mxu0
        %v1318 = vadd.f32 0.0, %v1317
        %v1319 = vpop.f32.mrb[0].mxu0
        %1320 = vmatprep.mubr.bf16.mxu0 0
        %1321 = vmatmul.mubr.bf16.gmra.mrb[0].mxu0 %v1211
        %v1322 = vpop.f32.mrb[0].mxu0
        %v1323 = vadd.f32 0.0, %v1322
        %v1324 = vpop.f32.mrb[0].mxu0
        %v1325 = vpop.f32.mrb[0].mxu0
        %v1326 = vadd.f32 0.0, %v1325
        %v1327 = vpop.f32.mrb[0].mxu0
        %1328 = vdwg.mxu0
        %v1329 = vadd.f32 %v1159, %v1299
        %v1330 = vadd.f32 %v1160, %v1302
        %v1331 = vadd.f32 %v1161, %v1307
        %v1332 = vadd.f32 %v1162, %v1310
        %v1333 = vadd.f32 %v1163, %v1315
        %v1334 = vadd.f32 %v1164, %v1318
        %v1335 = vadd.f32 %v1165, %v1323
        %v1336 = vadd.f32 %v1166, %v1326
        %v1337 = vld [vmem:[%s507] sm:$0xf]
        %v1338 = vld [vmem:[%s507 + $0x4] sm:$0x1]
        %v1339 = vld [vmem:[%s507 + $0x8] sm:$0xf]
        %v1340 = vld [vmem:[%s507 + $0xc] sm:$0x1]
        %v1341 = vld [vmem:[%s507 + $0x10] sm:$0xf]
        %v1342 = vld [vmem:[%s507 + $0x14] sm:$0x1]
        %v1343 = vld [vmem:[%s507 + $0x18] sm:$0xf]
        %v1344 = vld [vmem:[%s507 + $0x1c] sm:$0x1]
        %v1345 = vld [vmem:[%s507 + $0x20] sm:$0xf]
        %v1346 = vld [vmem:[%s507 + $0x24] sm:$0x1]
        %v1347 = vld [vmem:[%s507 + $0x28] sm:$0xf]
        %v1348 = vld [vmem:[%s507 + $0x2c] sm:$0x1]
        %v1349 = vld [vmem:[%s507 + $0x30] sm:$0xf]
        %v1350 = vld [vmem:[%s507 + $0x34] sm:$0x1]
        %v1351 = vld [vmem:[%s507 + $0x38] sm:$0xf]
        %v1352 = vld [vmem:[%s507 + $0x3c] sm:$0x1]
        %v1354 = vshrl.u32 %v1337, 16
        %v1356 = vrot.slane %v1354, 4
        %v1357 = vshll.u32 %v1337, 16
        %v1359 = vrot.slane %v1357, 5
        %v1360 = vor.u32 %v1356, %v1359
        %v1361 = vrot.slane %v1360, 4
        %v1363 = vshll.u32 %v1338, 16
        %v1365 = vrot.slane %v1363, 5
        %v1366 = vsel %vm558, %v1361, %v1365
        %v1368 = vshrl.u32 %v1339, 16
        %v1370 = vrot.slane %v1368, 4
        %v1371 = vshll.u32 %v1339, 16
        %v1373 = vrot.slane %v1371, 5
        %v1374 = vor.u32 %v1370, %v1373
        %v1375 = vrot.slane %v1374, 4
        %v1377 = vshll.u32 %v1340, 16
        %v1379 = vrot.slane %v1377, 5
        %v1380 = vsel %vm558, %v1375, %v1379
        %v1382 = vshrl.u32 %v1341, 16
        %v1384 = vrot.slane %v1382, 4
        %v1385 = vshll.u32 %v1341, 16
        %v1387 = vrot.slane %v1385, 5
        %v1388 = vor.u32 %v1384, %v1387
        %v1389 = vrot.slane %v1388, 4
        %v1391 = vshll.u32 %v1342, 16
        %v1393 = vrot.slane %v1391, 5
        %v1394 = vsel %vm558, %v1389, %v1393
        %v1396 = vshrl.u32 %v1343, 16
        %v1398 = vrot.slane %v1396, 4
        %v1399 = vshll.u32 %v1343, 16
        %v1401 = vrot.slane %v1399, 5
        %v1402 = vor.u32 %v1398, %v1401
        %v1403 = vrot.slane %v1402, 4
        %v1405 = vshll.u32 %v1344, 16
        %v1407 = vrot.slane %v1405, 5
        %v1408 = vsel %vm558, %v1403, %v1407
        %v1410 = vshrl.u32 %v1345, 16
        %v1412 = vrot.slane %v1410, 4
        %v1413 = vshll.u32 %v1345, 16
        %v1415 = vrot.slane %v1413, 5
        %v1416 = vor.u32 %v1412, %v1415
        %v1417 = vrot.slane %v1416, 4
        %v1419 = vshll.u32 %v1346, 16
        %v1421 = vrot.slane %v1419, 5
        %v1422 = vsel %vm558, %v1417, %v1421
        %v1424 = vshrl.u32 %v1347, 16
        %v1426 = vrot.slane %v1424, 4
        %v1427 = vshll.u32 %v1347, 16
        %v1429 = vrot.slane %v1427, 5
        %v1430 = vor.u32 %v1426, %v1429
        %v1431 = vrot.slane %v1430, 4
        %v1433 = vshll.u32 %v1348, 16
        %v1435 = vrot.slane %v1433, 5
        %v1436 = vsel %vm558, %v1431, %v1435
        %v1438 = vshrl.u32 %v1349, 16
        %v1440 = vrot.slane %v1438, 4
        %v1441 = vshll.u32 %v1349, 16
        %v1443 = vrot.slane %v1441, 5
        %v1444 = vor.u32 %v1440, %v1443
        %v1445 = vrot.slane %v1444, 4
        %v1447 = vshll.u32 %v1350, 16
        %v1449 = vrot.slane %v1447, 5
        %v1450 = vsel %vm558, %v1445, %v1449
        %v1452 = vshrl.u32 %v1351, 16
        %v1454 = vrot.slane %v1452, 4
        %v1455 = vshll.u32 %v1351, 16
        %v1457 = vrot.slane %v1455, 5
        %v1458 = vor.u32 %v1454, %v1457
        %v1459 = vrot.slane %v1458, 4
        %v1461 = vshll.u32 %v1352, 16
        %v1463 = vrot.slane %v1461, 5
        %v1464 = vsel %vm558, %v1459, %v1463
        %s1465 = scalar_lea.vmem [#allocation6], 256
        %v1466 = vld [vmem:[%s1465] sm:$0xf]
        %v1467 = vld [vmem:[%s1465 + $0x4] sm:$0xf]
        %v1468 = vld [vmem:[%s1465 + $0x8] sm:$0xf]
        %v1469 = vld [vmem:[%s1465 + $0xc] sm:$0xf]
        %v1470 = vld [vmem:[%s1465 + $0x10] sm:$0xf]
        %v1471 = vld [vmem:[%s1465 + $0x14] sm:$0xf]
        %v1472 = vld [vmem:[%s1465 + $0x18] sm:$0xf]
        %v1473 = vld [vmem:[%s1465 + $0x1c] sm:$0xf]
        %v1474 = vld [vmem:[%s1465 + $0x20] sm:$0xf]
        %v1475 = vld [vmem:[%s1465 + $0x24] sm:$0xf]
        %v1476 = vld [vmem:[%s1465 + $0x28] sm:$0xf]
        %v1477 = vld [vmem:[%s1465 + $0x2c] sm:$0xf]
        %v1478 = vld [vmem:[%s1465 + $0x30] sm:$0xf]
        %v1479 = vld [vmem:[%s1465 + $0x34] sm:$0xf]
        %v1480 = vld [vmem:[%s1465 + $0x38] sm:$0xf]
        %v1481 = vld [vmem:[%s1465 + $0x3c] sm:$0xf]
        %v1482 = vunpack.c.l.b16 %v1366
        %v1483 = vunpack.c.l.b16 %v1380
        %v1484 = vunpack.c.l.b16 %v1394
        %v1485 = vunpack.c.l.b16 %v1408
        %v1486 = vunpack.c.l.b16 %v1422
        %v1487 = vunpack.c.l.b16 %v1436
        %v1488 = vunpack.c.l.b16 %v1450
        %v1489 = vunpack.c.l.b16 %v1464
        %v1490 = vpack.c.b16 %v1483, %v1482
        %v1491 = vpack.c.b16 %v1485, %v1484
        %v1492 = vpack.c.b16 %v1487, %v1486
        %v1493 = vpack.c.b16 %v1489, %v1488
        %v1514 = vunpack.c.l.b16 %v1466
        %v1515 = vunpack.c.l.b16 %v1467
        %v1516 = vunpack.c.l.b16 %v1468
        %v1517 = vunpack.c.l.b16 %v1469
        %v1518 = vunpack.c.l.b16 %v1470
        %v1519 = vunpack.c.l.b16 %v1471
        %v1520 = vunpack.c.l.b16 %v1472
        %v1521 = vunpack.c.l.b16 %v1473
        %v1522 = vunpack.c.l.b16 %v1474
        %v1523 = vunpack.c.l.b16 %v1475
        %v1524 = vunpack.c.l.b16 %v1476
        %v1525 = vunpack.c.l.b16 %v1477
        %v1526 = vunpack.c.l.b16 %v1478
        %v1527 = vunpack.c.l.b16 %v1479
        %v1528 = vunpack.c.l.b16 %v1480
        %v1529 = vunpack.c.l.b16 %v1481
        %v1530 = vpack.c.b16 %v1515, %v1514
        %v1531 = vpack.c.b16 %v1517, %v1516
        %v1532 = vpack.c.b16 %v1519, %v1518
        %v1533 = vpack.c.b16 %v1521, %v1520
        %v1534 = vpack.c.b16 %v1523, %v1522
        %v1535 = vpack.c.b16 %v1525, %v1524
        %v1536 = vpack.c.b16 %v1527, %v1526
        %v1537 = vpack.c.b16 %v1529, %v1528
        %1546 = vmatprep.subr.bf16.mxu0 0
        %1547 = vmatpush1.bf16.msra.mxu0 %v1530
        %1548 = vmatprep.subr.bf16.mxu0 0
        %1549 = vmatpush1.bf16.msra.mxu0 %v1531
        %1550 = vmatprep.subr.bf16.mxu0 0
        %1551 = vmatpush1.bf16.msra.mxu0 %v1532
        %1552 = vmatprep.subr.bf16.mxu0 0
        %1553 = vmatpush1.bf16.msra.mxu0 %v1533
        %1554 = vmatprep.subr.bf16.mxu0 0
        %1555 = vmatpush1.bf16.msra.mxu0 %v1534
        %1556 = vmatprep.subr.bf16.mxu0 0
        %1557 = vmatpush1.bf16.msra.mxu0 %v1535
        %1558 = vmatprep.subr.bf16.mxu0 0
        %1559 = vmatpush1.bf16.msra.mxu0 %v1536
        %1560 = vmatprep.subr.bf16.mxu0 0
        %1561 = vmatpush1.bf16.msra.mxu0 %v1537
        %1562 = vmatprep.subr.bf16.mxu0 0
        %1563 = vmatpush1.bf16.msra.mxu0 0
        %1564 = vmatprep.subr.bf16.mxu0 0
        %1565 = vmatpush1.bf16.msra.mxu0 0
        %1566 = vmatprep.subr.bf16.mxu0 0
        %1567 = vmatpush1.bf16.msra.mxu0 0
        %1568 = vmatprep.subr.bf16.mxu0 0
        %1569 = vmatpush1.bf16.msra.mxu0 0
        %1570 = vmatprep.subr.bf16.mxu0 0
        %1571 = vmatpush1.bf16.msra.mxu0 0
        %1572 = vmatprep.subr.bf16.mxu0 0
        %1573 = vmatpush1.bf16.msra.mxu0 0
        %1574 = vmatprep.subr.bf16.mxu0 0
        %1575 = vmatpush1.bf16.msra.mxu0 0
        %1576 = vmatprep.subr.bf16.mxu0 0
        %1577 = vmatpush1.bf16.msra.mxu0 0
        %1578 = vmatprep.mubr.bf16.mxu0 0
        %1579 = vmatmul.mubr.bf16.gmra.mrb[0].mxu0 %v1490
        %v1580 = vpop.f32.mrb[0].mxu0
        %v1581 = vadd.f32 0.0, %v1580
        %v1582 = vpop.f32.mrb[0].mxu0
        %v1583 = vpop.f32.mrb[0].mxu0
        %v1584 = vadd.f32 0.0, %v1583
        %v1585 = vpop.f32.mrb[0].mxu0
        %1586 = vmatprep.mubr.bf16.mxu0 0
        %1587 = vmatmul.mubr.bf16.gmra.mrb[0].mxu0 %v1491
        %v1588 = vpop.f32.mrb[0].mxu0
        %v1589 = vadd.f32 0.0, %v1588
        %v1590 = vpop.f32.mrb[0].mxu0
        %v1591 = vpop.f32.mrb[0].mxu0
        %v1592 = vadd.f32 0.0, %v1591
        %v1593 = vpop.f32.mrb[0].mxu0
        %1594 = vmatprep.mubr.bf16.mxu0 0
        %1595 = vmatmul.mubr.bf16.gmra.mrb[0].mxu0 %v1492
        %v1596 = vpop.f32.mrb[0].mxu0
        %v1597 = vadd.f32 0.0, %v1596
        %v1598 = vpop.f32.mrb[0].mxu0
        %v1599 = vpop.f32.mrb[0].mxu0
        %v1600 = vadd.f32 0.0, %v1599
        %v1601 = vpop.f32.mrb[0].mxu0
        %1602 = vmatprep.mubr.bf16.mxu0 0
        %1603 = vmatmul.mubr.bf16.gmra.mrb[0].mxu0 %v1493
        %v1604 = vpop.f32.mrb[0].mxu0
        %v1605 = vadd.f32 0.0, %v1604
        %v1606 = vpop.f32.mrb[0].mxu0
        %v1607 = vpop.f32.mrb[0].mxu0
        %v1608 = vadd.f32 0.0, %v1607
        %v1609 = vpop.f32.mrb[0].mxu0
        %1610 = vdwg.mxu0
        %v1611 = vadd.f32 %v1329, %v1581
        %v1612 = vadd.f32 %v1330, %v1584
        %v1613 = vadd.f32 %v1331, %v1589
        %v1614 = vadd.f32 %v1332, %v1592
        %v1615 = vadd.f32 %v1333, %v1597
        %v1616 = vadd.f32 %v1334, %v1600
        %v1617 = vadd.f32 %v1335, %v1605
        %v1618 = vadd.f32 %v1336, %v1608
        %v1619 = vld [vmem:[%s507] sm:$0xe]
        %v1620 = vld [vmem:[%s507 + $0x8] sm:$0xe]
        %v1621 = vld [vmem:[%s507 + $0x10] sm:$0xe]
        %v1622 = vld [vmem:[%s507 + $0x18] sm:$0xe]
        %v1623 = vld [vmem:[%s507 + $0x20] sm:$0xe]
        %v1624 = vld [vmem:[%s507 + $0x28] sm:$0xe]
        %v1625 = vld [vmem:[%s507 + $0x30] sm:$0xe]
        %v1626 = vld [vmem:[%s507 + $0x38] sm:$0xe]
        %v1643 = vrot.slane %v1619, 5
        %v1644 = vrot.slane %v1643, 4
        %v1645 = vrot.slane %v1338, 5
        %v1646 = vsel %vm980, %v1644, %v1645
        %v1647 = vrot.slane %v1620, 5
        %v1648 = vrot.slane %v1647, 4
        %v1649 = vrot.slane %v1340, 5
        %v1650 = vsel %vm980, %v1648, %v1649
        %v1651 = vrot.slane %v1621, 5
        %v1652 = vrot.slane %v1651, 4
        %v1653 = vrot.slane %v1342, 5
        %v1654 = vsel %vm980, %v1652, %v1653
        %v1655 = vrot.slane %v1622, 5
        %v1656 = vrot.slane %v1655, 4
        %v1657 = vrot.slane %v1344, 5
        %v1658 = vsel %vm980, %v1656, %v1657
        %v1659 = vrot.slane %v1623, 5
        %v1660 = vrot.slane %v1659, 4
        %v1661 = vrot.slane %v1346, 5
        %v1662 = vsel %vm980, %v1660, %v1661
        %v1663 = vrot.slane %v1624, 5
        %v1664 = vrot.slane %v1663, 4
        %v1665 = vrot.slane %v1348, 5
        %v1666 = vsel %vm980, %v1664, %v1665
        %v1667 = vrot.slane %v1625, 5
        %v1668 = vrot.slane %v1667, 4
        %v1669 = vrot.slane %v1350, 5
        %v1670 = vsel %vm980, %v1668, %v1669
        %v1671 = vrot.slane %v1626, 5
        %v1672 = vrot.slane %v1671, 4
        %v1673 = vrot.slane %v1352, 5
        %v1674 = vsel %vm980, %v1672, %v1673
        %s1675 = scalar_lea.vmem [#allocation6], 320
        %v1676 = vld [vmem:[%s1675] sm:$0xf]
        %v1677 = vld [vmem:[%s1675 + $0x4] sm:$0xf]
        %v1678 = vld [vmem:[%s1675 + $0x8] sm:$0xf]
        %v1679 = vld [vmem:[%s1675 + $0xc] sm:$0xf]
        %v1680 = vld [vmem:[%s1675 + $0x10] sm:$0xf]
        %v1681 = vld [vmem:[%s1675 + $0x14] sm:$0xf]
        %v1682 = vld [vmem:[%s1675 + $0x18] sm:$0xf]
        %v1683 = vld [vmem:[%s1675 + $0x1c] sm:$0xf]
        %v1684 = vld [vmem:[%s1675 + $0x20] sm:$0xf]
        %v1685 = vld [vmem:[%s1675 + $0x24] sm:$0xf]
        %v1686 = vld [vmem:[%s1675 + $0x28] sm:$0xf]
        %v1687 = vld [vmem:[%s1675 + $0x2c] sm:$0xf]
        %v1688 = vld [vmem:[%s1675 + $0x30] sm:$0xf]
        %v1689 = vld [vmem:[%s1675 + $0x34] sm:$0xf]
        %v1690 = vld [vmem:[%s1675 + $0x38] sm:$0xf]
        %v1691 = vld [vmem:[%s1675 + $0x3c] sm:$0xf]
        %v1692 = vunpack.c.l.b16 %v1646
        %v1693 = vunpack.c.l.b16 %v1650
        %v1694 = vunpack.c.l.b16 %v1654
        %v1695 = vunpack.c.l.b16 %v1658
        %v1696 = vunpack.c.l.b16 %v1662
        %v1697 = vunpack.c.l.b16 %v1666
        %v1698 = vunpack.c.l.b16 %v1670
        %v1699 = vunpack.c.l.b16 %v1674
        %v1700 = vpack.c.b16 %v1693, %v1692
        %v1701 = vpack.c.b16 %v1695, %v1694
        %v1702 = vpack.c.b16 %v1697, %v1696
        %v1703 = vpack.c.b16 %v1699, %v1698
        %v1724 = vunpack.c.l.b16 %v1676
        %v1725 = vunpack.c.l.b16 %v1677
        %v1726 = vunpack.c.l.b16 %v1678
        %v1727 = vunpack.c.l.b16 %v1679
        %v1728 = vunpack.c.l.b16 %v1680
        %v1729 = vunpack.c.l.b16 %v1681
        %v1730 = vunpack.c.l.b16 %v1682
        %v1731 = vunpack.c.l.b16 %v1683
        %v1732 = vunpack.c.l.b16 %v1684
        %v1733 = vunpack.c.l.b16 %v1685
        %v1734 = vunpack.c.l.b16 %v1686
        %v1735 = vunpack.c.l.b16 %v1687
        %v1736 = vunpack.c.l.b16 %v1688
        %v1737 = vunpack.c.l.b16 %v1689
        %v1738 = vunpack.c.l.b16 %v1690
        %v1739 = vunpack.c.l.b16 %v1691
        %v1740 = vpack.c.b16 %v1725, %v1724
        %v1741 = vpack.c.b16 %v1727, %v1726
        %v1742 = vpack.c.b16 %v1729, %v1728
        %v1743 = vpack.c.b16 %v1731, %v1730
        %v1744 = vpack.c.b16 %v1733, %v1732
        %v1745 = vpack.c.b16 %v1735, %v1734
        %v1746 = vpack.c.b16 %v1737, %v1736
        %v1747 = vpack.c.b16 %v1739, %v1738
        %1756 = vmatprep.subr.bf16.mxu0 0
        %1757 = vmatpush1.bf16.msra.mxu0 %v1740
        %1758 = vmatprep.subr.bf16.mxu0 0
        %1759 = vmatpush1.bf16.msra.mxu0 %v1741
        %1760 = vmatprep.subr.bf16.mxu0 0
        %1761 = vmatpush1.bf16.msra.mxu0 %v1742
        %1762 = vmatprep.subr.bf16.mxu0 0
        %1763 = vmatpush1.bf16.msra.mxu0 %v1743
        %1764 = vmatprep.subr.bf16.mxu0 0
        %1765 = vmatpush1.bf16.msra.mxu0 %v1744
        %1766 = vmatprep.subr.bf16.mxu0 0
        %1767 = vmatpush1.bf16.msra.mxu0 %v1745
        %1768 = vmatprep.subr.bf16.mxu0 0
        %1769 = vmatpush1.bf16.msra.mxu0 %v1746
        %1770 = vmatprep.subr.bf16.mxu0 0
        %1771 = vmatpush1.bf16.msra.mxu0 %v1747
        %1772 = vmatprep.subr.bf16.mxu0 0
        %1773 = vmatpush1.bf16.msra.mxu0 0
        %1774 = vmatprep.subr.bf16.mxu0 0
        %1775 = vmatpush1.bf16.msra.mxu0 0
        %1776 = vmatprep.subr.bf16.mxu0 0
        %1777 = vmatpush1.bf16.msra.mxu0 0
        %1778 = vmatprep.subr.bf16.mxu0 0
        %1779 = vmatpush1.bf16.msra.mxu0 0
        %1780 = vmatprep.subr.bf16.mxu0 0
        %1781 = vmatpush1.bf16.msra.mxu0 0
        %1782 = vmatprep.subr.bf16.mxu0 0
        %1783 = vmatpush1.bf16.msra.mxu0 0
        %1784 = vmatprep.subr.bf16.mxu0 0
        %1785 = vmatpush1.bf16.msra.mxu0 0
        %1786 = vmatprep.subr.bf16.mxu0 0
        %1787 = vmatpush1.bf16.msra.mxu0 0
        %1788 = vmatprep.mubr.bf16.mxu0 0
        %1789 = vmatmul.mubr.bf16.gmra.mrb[0].mxu0 %v1700
        %v1790 = vpop.f32.mrb[0].mxu0
        %v1791 = vadd.f32 0.0, %v1790
        %v1792 = vpop.f32.mrb[0].mxu0
        %v1793 = vpop.f32.mrb[0].mxu0
        %v1794 = vadd.f32 0.0, %v1793
        %v1795 = vpop.f32.mrb[0].mxu0
        %1796 = vmatprep.mubr.bf16.mxu0 0
        %1797 = vmatmul.mubr.bf16.gmra.mrb[0].mxu0 %v1701
        %v1798 = vpop.f32.mrb[0].mxu0
        %v1799 = vadd.f32 0.0, %v1798
        %v1800 = vpop.f32.mrb[0].mxu0
        %v1801 = vpop.f32.mrb[0].mxu0
        %v1802 = vadd.f32 0.0, %v1801
        %v1803 = vpop.f32.mrb[0].mxu0
        %1804 = vmatprep.mubr.bf16.mxu0 0
        %1805 = vmatmul.mubr.bf16.gmra.mrb[0].mxu0 %v1702
        %v1806 = vpop.f32.mrb[0].mxu0
        %v1807 = vadd.f32 0.0, %v1806
        %v1808 = vpop.f32.mrb[0].mxu0
        %v1809 = vpop.f32.mrb[0].mxu0
        %v1810 = vadd.f32 0.0, %v1809
        %v1811 = vpop.f32.mrb[0].mxu0
        %1812 = vmatprep.mubr.bf16.mxu0 0
        %1813 = vmatmul.mubr.bf16.gmra.mrb[0].mxu0 %v1703
        %v1814 = vpop.f32.mrb[0].mxu0
        %v1815 = vadd.f32 0.0, %v1814
        %v1816 = vpop.f32.mrb[0].mxu0
        %v1817 = vpop.f32.mrb[0].mxu0
        %v1818 = vadd.f32 0.0, %v1817
        %v1819 = vpop.f32.mrb[0].mxu0
        %1820 = vdwg.mxu0
        %v1821 = vadd.f32 %v1611, %v1791
        %v1822 = vadd.f32 %v1612, %v1794
        %v1823 = vadd.f32 %v1613, %v1799
        %v1824 = vadd.f32 %v1614, %v1802
        %v1825 = vadd.f32 %v1615, %v1807
        %v1826 = vadd.f32 %v1616, %v1810
        %v1827 = vadd.f32 %v1617, %v1815
        %v1828 = vadd.f32 %v1618, %v1818
        %s1829 = scalar_lea.vmem [#allocation2], 16
        %v1830 = vld [vmem:[%s1829] sm:$0xf]
        %v1831 = vld [vmem:[%s1829 + $0x8] sm:$0xf]
        %v1832 = vld [vmem:[%s1829 + $0x10] sm:$0xf]
        %v1833 = vld [vmem:[%s1829 + $0x18] sm:$0xf]
        %v1834 = vld [vmem:[%s1829 + $0x20] sm:$0xf]
        %v1835 = vld [vmem:[%s1829 + $0x28] sm:$0xf]
        %v1836 = vld [vmem:[%s1829 + $0x30] sm:$0xf]
        %v1837 = vld [vmem:[%s1829 + $0x38] sm:$0xf]
        %s1838 = scalar_lea.vmem [#allocation6], 384
        %v1839 = vld [vmem:[%s1838] sm:$0xf]
        %v1840 = vld [vmem:[%s1838 + $0x4] sm:$0xf]
        %v1841 = vld [vmem:[%s1838 + $0x8] sm:$0xf]
        %v1842 = vld [vmem:[%s1838 + $0xc] sm:$0xf]
        %v1843 = vld [vmem:[%s1838 + $0x10] sm:$0xf]
        %v1844 = vld [vmem:[%s1838 + $0x14] sm:$0xf]
        %v1845 = vld [vmem:[%s1838 + $0x18] sm:$0xf]
        %v1846 = vld [vmem:[%s1838 + $0x1c] sm:$0xf]
        %v1847 = vld [vmem:[%s1838 + $0x20] sm:$0xf]
        %v1848 = vld [vmem:[%s1838 + $0x24] sm:$0xf]
        %v1849 = vld [vmem:[%s1838 + $0x28] sm:$0xf]
        %v1850 = vld [vmem:[%s1838 + $0x2c] sm:$0xf]
        %v1851 = vld [vmem:[%s1838 + $0x30] sm:$0xf]
        %v1852 = vld [vmem:[%s1838 + $0x34] sm:$0xf]
        %v1853 = vld [vmem:[%s1838 + $0x38] sm:$0xf]
        %v1854 = vld [vmem:[%s1838 + $0x3c] sm:$0xf]
        %v1863 = vunpack.c.l.b16 %v1830
        %v1864 = vunpack.c.l.b16 %v1831
        %v1865 = vunpack.c.l.b16 %v1832
        %v1866 = vunpack.c.l.b16 %v1833
        %v1867 = vunpack.c.l.b16 %v1834
        %v1868 = vunpack.c.l.b16 %v1835
        %v1869 = vunpack.c.l.b16 %v1836
        %v1870 = vunpack.c.l.b16 %v1837
        %v1871 = vpack.c.b16 %v1864, %v1863
        %v1872 = vpack.c.b16 %v1866, %v1865
        %v1873 = vpack.c.b16 %v1868, %v1867
        %v1874 = vpack.c.b16 %v1870, %v1869
        %v1895 = vunpack.c.l.b16 %v1839
        %v1896 = vunpack.c.l.b16 %v1840
        %v1897 = vunpack.c.l.b16 %v1841
        %v1898 = vunpack.c.l.b16 %v1842
        %v1899 = vunpack.c.l.b16 %v1843
        %v1900 = vunpack.c.l.b16 %v1844
        %v1901 = vunpack.c.l.b16 %v1845
        %v1902 = vunpack.c.l.b16 %v1846
        %v1903 = vunpack.c.l.b16 %v1847
        %v1904 = vunpack.c.l.b16 %v1848
        %v1905 = vunpack.c.l.b16 %v1849
        %v1906 = vunpack.c.l.b16 %v1850
        %v1907 = vunpack.c.l.b16 %v1851
        %v1908 = vunpack.c.l.b16 %v1852
        %v1909 = vunpack.c.l.b16 %v1853
        %v1910 = vunpack.c.l.b16 %v1854
        %v1911 = vpack.c.b16 %v1896, %v1895
        %v1912 = vpack.c.b16 %v1898, %v1897
        %v1913 = vpack.c.b16 %v1900, %v1899
        %v1914 = vpack.c.b16 %v1902, %v1901
        %v1915 = vpack.c.b16 %v1904, %v1903
        %v1916 = vpack.c.b16 %v1906, %v1905
        %v1917 = vpack.c.b16 %v1908, %v1907
        %v1918 = vpack.c.b16 %v1910, %v1909
        %1927 = vmatprep.subr.bf16.mxu0 0
        %1928 = vmatpush1.bf16.msra.mxu0 %v1911
        %1929 = vmatprep.subr.bf16.mxu0 0
        %1930 = vmatpush1.bf16.msra.mxu0 %v1912
        %1931 = vmatprep.subr.bf16.mxu0 0
        %1932 = vmatpush1.bf16.msra.mxu0 %v1913
        %1933 = vmatprep.subr.bf16.mxu0 0
        %1934 = vmatpush1.bf16.msra.mxu0 %v1914
        %1935 = vmatprep.subr.bf16.mxu0 0
        %1936 = vmatpush1.bf16.msra.mxu0 %v1915
        %1937 = vmatprep.subr.bf16.mxu0 0
        %1938 = vmatpush1.bf16.msra.mxu0 %v1916
        %1939 = vmatprep.subr.bf16.mxu0 0
        %1940 = vmatpush1.bf16.msra.mxu0 %v1917
        %1941 = vmatprep.subr.bf16.mxu0 0
        %1942 = vmatpush1.bf16.msra.mxu0 %v1918
        %1943 = vmatprep.subr.bf16.mxu0 0
        %1944 = vmatpush1.bf16.msra.mxu0 0
        %1945 = vmatprep.subr.bf16.mxu0 0
        %1946 = vmatpush1.bf16.msra.mxu0 0
        %1947 = vmatprep.subr.bf16.mxu0 0
        %1948 = vmatpush1.bf16.msra.mxu0 0
        %1949 = vmatprep.subr.bf16.mxu0 0
        %1950 = vmatpush1.bf16.msra.mxu0 0
        %1951 = vmatprep.subr.bf16.mxu0 0
        %1952 = vmatpush1.bf16.msra.mxu0 0
        %1953 = vmatprep.subr.bf16.mxu0 0
        %1954 = vmatpush1.bf16.msra.mxu0 0
        %1955 = vmatprep.subr.bf16.mxu0 0
        %1956 = vmatpush1.bf16.msra.mxu0 0
        %1957 = vmatprep.subr.bf16.mxu0 0
        %1958 = vmatpush1.bf16.msra.mxu0 0
        %1959 = vmatprep.mubr.bf16.mxu0 0
        %1960 = vmatmul.mubr.bf16.gmra.mrb[0].mxu0 %v1871
        %v1961 = vpop.f32.mrb[0].mxu0
        %v1962 = vadd.f32 0.0, %v1961
        %v1963 = vpop.f32.mrb[0].mxu0
        %v1964 = vpop.f32.mrb[0].mxu0
        %v1965 = vadd.f32 0.0, %v1964
        %v1966 = vpop.f32.mrb[0].mxu0
        %1967 = vmatprep.mubr.bf16.mxu0 0
        %1968 = vmatmul.mubr.bf16.gmra.mrb[0].mxu0 %v1872
        %v1969 = vpop.f32.mrb[0].mxu0
        %v1970 = vadd.f32 0.0, %v1969
        %v1971 = vpop.f32.mrb[0].mxu0
        %v1972 = vpop.f32.mrb[0].mxu0
        %v1973 = vadd.f32 0.0, %v1972
        %v1974 = vpop.f32.mrb[0].mxu0
        %1975 = vmatprep.mubr.bf16.mxu0 0
        %1976 = vmatmul.mubr.bf16.gmra.mrb[0].mxu0 %v1873
        %v1977 = vpop.f32.mrb[0].mxu0
        %v1978 = vadd.f32 0.0, %v1977
        %v1979 = vpop.f32.mrb[0].mxu0
        %v1980 = vpop.f32.mrb[0].mxu0
        %v1981 = vadd.f32 0.0, %v1980
        %v1982 = vpop.f32.mrb[0].mxu0
        %1983 = vmatprep.mubr.bf16.mxu0 0
        %1984 = vmatmul.mubr.bf16.gmra.mrb[0].mxu0 %v1874
        %v1985 = vpop.f32.mrb[0].mxu0
        %v1986 = vadd.f32 0.0, %v1985
        %v1987 = vpop.f32.mrb[0].mxu0
        %v1988 = vpop.f32.mrb[0].mxu0
        %v1989 = vadd.f32 0.0, %v1988
        %v1990 = vpop.f32.mrb[0].mxu0
        %1991 = vdwg.mxu0
        %v1992 = vadd.f32 %v1821, %v1962
        %v1993 = vadd.f32 %v1822, %v1965
        %v1994 = vadd.f32 %v1823, %v1970
        %v1995 = vadd.f32 %v1824, %v1973
        %v1996 = vadd.f32 %v1825, %v1978
        %v1997 = vadd.f32 %v1826, %v1981
        %v1998 = vadd.f32 %v1827, %v1986
        %v1999 = vadd.f32 %v1828, %v1989
        %v2000 = vld [vmem:[%s1829] sm:$0xf]
        %v2001 = vld [vmem:[%s1829 + $0x4] sm:$0x1]
        %v2002 = vld [vmem:[%s1829 + $0x8] sm:$0xf]
        %v2003 = vld [vmem:[%s1829 + $0xc] sm:$0x1]
        %v2004 = vld [vmem:[%s1829 + $0x10] sm:$0xf]
        %v2005 = vld [vmem:[%s1829 + $0x14] sm:$0x1]
        %v2006 = vld [vmem:[%s1829 + $0x18] sm:$0xf]
        %v2007 = vld [vmem:[%s1829 + $0x1c] sm:$0x1]
        %v2008 = vld [vmem:[%s1829 + $0x20] sm:$0xf]
        %v2009 = vld [vmem:[%s1829 + $0x24] sm:$0x1]
        %v2010 = vld [vmem:[%s1829 + $0x28] sm:$0xf]
        %v2011 = vld [vmem:[%s1829 + $0x2c] sm:$0x1]
        %v2012 = vld [vmem:[%s1829 + $0x30] sm:$0xf]
        %v2013 = vld [vmem:[%s1829 + $0x34] sm:$0x1]
        %v2014 = vld [vmem:[%s1829 + $0x38] sm:$0xf]
        %v2015 = vld [vmem:[%s1829 + $0x3c] sm:$0x1]
        %v2017 = vshrl.u32 %v2000, 16
        %v2019 = vrot.slane %v2017, 4
        %v2020 = vshll.u32 %v2000, 16
        %v2022 = vrot.slane %v2020, 5
        %v2023 = vor.u32 %v2019, %v2022
        %v2024 = vrot.slane %v2023, 4
        %v2026 = vshll.u32 %v2001, 16
        %v2028 = vrot.slane %v2026, 5
        %v2029 = vsel %vm558, %v2024, %v2028
        %v2031 = vshrl.u32 %v2002, 16
        %v2033 = vrot.slane %v2031, 4
        %v2034 = vshll.u32 %v2002, 16
        %v2036 = vrot.slane %v2034, 5
        %v2037 = vor.u32 %v2033, %v2036
        %v2038 = vrot.slane %v2037, 4
        %v2040 = vshll.u32 %v2003, 16
        %v2042 = vrot.slane %v2040, 5
        %v2043 = vsel %vm558, %v2038, %v2042
        %v2045 = vshrl.u32 %v2004, 16
        %v2047 = vrot.slane %v2045, 4
        %v2048 = vshll.u32 %v2004, 16
        %v2050 = vrot.slane %v2048, 5
        %v2051 = vor.u32 %v2047, %v2050
        %v2052 = vrot.slane %v2051, 4
        %v2054 = vshll.u32 %v2005, 16
        %v2056 = vrot.slane %v2054, 5
        %v2057 = vsel %vm558, %v2052, %v2056
        %v2059 = vshrl.u32 %v2006, 16
        %v2061 = vrot.slane %v2059, 4
        %v2062 = vshll.u32 %v2006, 16
        %v2064 = vrot.slane %v2062, 5
        %v2065 = vor.u32 %v2061, %v2064
        %v2066 = vrot.slane %v2065, 4
        %v2068 = vshll.u32 %v2007, 16
        %v2070 = vrot.slane %v2068, 5
        %v2071 = vsel %vm558, %v2066, %v2070
        %v2073 = vshrl.u32 %v2008, 16
        %v2075 = vrot.slane %v2073, 4
        %v2076 = vshll.u32 %v2008, 16
        %v2078 = vrot.slane %v2076, 5
        %v2079 = vor.u32 %v2075, %v2078
        %v2080 = vrot.slane %v2079, 4
        %v2082 = vshll.u32 %v2009, 16
        %v2084 = vrot.slane %v2082, 5
        %v2085 = vsel %vm558, %v2080, %v2084
        %v2087 = vshrl.u32 %v2010, 16
        %v2089 = vrot.slane %v2087, 4
        %v2090 = vshll.u32 %v2010, 16
        %v2092 = vrot.slane %v2090, 5
        %v2093 = vor.u32 %v2089, %v2092
        %v2094 = vrot.slane %v2093, 4
        %v2096 = vshll.u32 %v2011, 16
        %v2098 = vrot.slane %v2096, 5
        %v2099 = vsel %vm558, %v2094, %v2098
        %v2101 = vshrl.u32 %v2012, 16
        %v2103 = vrot.slane %v2101, 4
        %v2104 = vshll.u32 %v2012, 16
        %v2106 = vrot.slane %v2104, 5
        %v2107 = vor.u32 %v2103, %v2106
        %v2108 = vrot.slane %v2107, 4
        %v2110 = vshll.u32 %v2013, 16
        %v2112 = vrot.slane %v2110, 5
        %v2113 = vsel %vm558, %v2108, %v2112
        %v2115 = vshrl.u32 %v2014, 16
        %v2117 = vrot.slane %v2115, 4
        %v2118 = vshll.u32 %v2014, 16
        %v2120 = vrot.slane %v2118, 5
        %v2121 = vor.u32 %v2117, %v2120
        %v2122 = vrot.slane %v2121, 4
        %v2124 = vshll.u32 %v2015, 16
        %v2126 = vrot.slane %v2124, 5
        %v2127 = vsel %vm558, %v2122, %v2126
        %s2128 = scalar_lea.vmem [#allocation6], 448
        %v2129 = vld [vmem:[%s2128] sm:$0xf]
        %v2130 = vld [vmem:[%s2128 + $0x4] sm:$0xf]
        %v2131 = vld [vmem:[%s2128 + $0x8] sm:$0xf]
        %v2132 = vld [vmem:[%s2128 + $0xc] sm:$0xf]
        %v2133 = vld [vmem:[%s2128 + $0x10] sm:$0xf]
        %v2134 = vld [vmem:[%s2128 + $0x14] sm:$0xf]
        %v2135 = vld [vmem:[%s2128 + $0x18] sm:$0xf]
        %v2136 = vld [vmem:[%s2128 + $0x1c] sm:$0xf]
        %v2137 = vld [vmem:[%s2128 + $0x20] sm:$0xf]
        %v2138 = vld [vmem:[%s2128 + $0x24] sm:$0xf]
        %v2139 = vld [vmem:[%s2128 + $0x28] sm:$0xf]
        %v2140 = vld [vmem:[%s2128 + $0x2c] sm:$0xf]
        %v2141 = vld [vmem:[%s2128 + $0x30] sm:$0xf]
        %v2142 = vld [vmem:[%s2128 + $0x34] sm:$0xf]
        %v2143 = vld [vmem:[%s2128 + $0x38] sm:$0xf]
        %v2144 = vld [vmem:[%s2128 + $0x3c] sm:$0xf]
        %v2145 = vunpack.c.l.b16 %v2029
        %v2146 = vunpack.c.l.b16 %v2043
        %v2147 = vunpack.c.l.b16 %v2057
        %v2148 = vunpack.c.l.b16 %v2071
        %v2149 = vunpack.c.l.b16 %v2085
        %v2150 = vunpack.c.l.b16 %v2099
        %v2151 = vunpack.c.l.b16 %v2113
        %v2152 = vunpack.c.l.b16 %v2127
        %v2153 = vpack.c.b16 %v2146, %v2145
        %v2154 = vpack.c.b16 %v2148, %v2147
        %v2155 = vpack.c.b16 %v2150, %v2149
        %v2156 = vpack.c.b16 %v2152, %v2151
        %v2177 = vunpack.c.l.b16 %v2129
        %v2178 = vunpack.c.l.b16 %v2130
        %v2179 = vunpack.c.l.b16 %v2131
        %v2180 = vunpack.c.l.b16 %v2132
        %v2181 = vunpack.c.l.b16 %v2133
        %v2182 = vunpack.c.l.b16 %v2134
        %v2183 = vunpack.c.l.b16 %v2135
        %v2184 = vunpack.c.l.b16 %v2136
        %v2185 = vunpack.c.l.b16 %v2137
        %v2186 = vunpack.c.l.b16 %v2138
        %v2187 = vunpack.c.l.b16 %v2139
        %v2188 = vunpack.c.l.b16 %v2140
        %v2189 = vunpack.c.l.b16 %v2141
        %v2190 = vunpack.c.l.b16 %v2142
        %v2191 = vunpack.c.l.b16 %v2143
        %v2192 = vunpack.c.l.b16 %v2144
        %v2193 = vpack.c.b16 %v2178, %v2177
        %v2194 = vpack.c.b16 %v2180, %v2179
        %v2195 = vpack.c.b16 %v2182, %v2181
        %v2196 = vpack.c.b16 %v2184, %v2183
        %v2197 = vpack.c.b16 %v2186, %v2185
        %v2198 = vpack.c.b16 %v2188, %v2187
        %v2199 = vpack.c.b16 %v2190, %v2189
        %v2200 = vpack.c.b16 %v2192, %v2191
        %2209 = vmatprep.subr.bf16.mxu0 0
        %2210 = vmatpush1.bf16.msra.mxu0 %v2193
        %2211 = vmatprep.subr.bf16.mxu0 0
        %2212 = vmatpush1.bf16.msra.mxu0 %v2194
        %2213 = vmatprep.subr.bf16.mxu0 0
        %2214 = vmatpush1.bf16.msra.mxu0 %v2195
        %2215 = vmatprep.subr.bf16.mxu0 0
        %2216 = vmatpush1.bf16.msra.mxu0 %v2196
        %2217 = vmatprep.subr.bf16.mxu0 0
        %2218 = vmatpush1.bf16.msra.mxu0 %v2197
        %2219 = vmatprep.subr.bf16.mxu0 0
        %2220 = vmatpush1.bf16.msra.mxu0 %v2198
        %2221 = vmatprep.subr.bf16.mxu0 0
        %2222 = vmatpush1.bf16.msra.mxu0 %v2199
        %2223 = vmatprep.subr.bf16.mxu0 0
        %2224 = vmatpush1.bf16.msra.mxu0 %v2200
        %2225 = vmatprep.subr.bf16.mxu0 0
        %2226 = vmatpush1.bf16.msra.mxu0 0
        %2227 = vmatprep.subr.bf16.mxu0 0
        %2228 = vmatpush1.bf16.msra.mxu0 0
        %2229 = vmatprep.subr.bf16.mxu0 0
        %2230 = vmatpush1.bf16.msra.mxu0 0
        %2231 = vmatprep.subr.bf16.mxu0 0
        %2232 = vmatpush1.bf16.msra.mxu0 0
        %2233 = vmatprep.subr.bf16.mxu0 0
        %2234 = vmatpush1.bf16.msra.mxu0 0
        %2235 = vmatprep.subr.bf16.mxu0 0
        %2236 = vmatpush1.bf16.msra.mxu0 0
        %2237 = vmatprep.subr.bf16.mxu0 0
        %2238 = vmatpush1.bf16.msra.mxu0 0
        %2239 = vmatprep.subr.bf16.mxu0 0
        %2240 = vmatpush1.bf16.msra.mxu0 0
        %2241 = vmatprep.mubr.bf16.mxu0 0
        %2242 = vmatmul.mubr.bf16.gmra.mrb[0].mxu0 %v2153
        %v2243 = vpop.f32.mrb[0].mxu0
        %v2244 = vadd.f32 0.0, %v2243
        %v2245 = vpop.f32.mrb[0].mxu0
        %v2246 = vpop.f32.mrb[0].mxu0
        %v2247 = vadd.f32 0.0, %v2246
        %v2248 = vpop.f32.mrb[0].mxu0
        %2249 = vmatprep.mubr.bf16.mxu0 0
        %2250 = vmatmul.mubr.bf16.gmra.mrb[0].mxu0 %v2154
        %v2251 = vpop.f32.mrb[0].mxu0
        %v2252 = vadd.f32 0.0, %v2251
        %v2253 = vpop.f32.mrb[0].mxu0
        %v2254 = vpop.f32.mrb[0].mxu0
        %v2255 = vadd.f32 0.0, %v2254
        %v2256 = vpop.f32.mrb[0].mxu0
        %2257 = vmatprep.mubr.bf16.mxu0 0
        %2258 = vmatmul.mubr.bf16.gmra.mrb[0].mxu0 %v2155
        %v2259 = vpop.f32.mrb[0].mxu0
        %v2260 = vadd.f32 0.0, %v2259
        %v2261 = vpop.f32.mrb[0].mxu0
        %v2262 = vpop.f32.mrb[0].mxu0
        %v2263 = vadd.f32 0.0, %v2262
        %v2264 = vpop.f32.mrb[0].mxu0
        %2265 = vmatprep.mubr.bf16.mxu0 0
        %2266 = vmatmul.mubr.bf16.gmra.mrb[0].mxu0 %v2156
        %v2267 = vpop.f32.mrb[0].mxu0
        %v2268 = vadd.f32 0.0, %v2267
        %v2269 = vpop.f32.mrb[0].mxu0
        %v2270 = vpop.f32.mrb[0].mxu0
        %v2271 = vadd.f32 0.0, %v2270
        %v2272 = vpop.f32.mrb[0].mxu0
        %2273 = vdwg.mxu0
        %v2274 = vadd.f32 %v1992, %v2244
        %v2275 = vadd.f32 %v1993, %v2247
        %v2276 = vadd.f32 %v1994, %v2252
        %v2277 = vadd.f32 %v1995, %v2255
        %v2278 = vadd.f32 %v1996, %v2260
        %v2279 = vadd.f32 %v1997, %v2263
        %v2280 = vadd.f32 %v1998, %v2268
        %v2281 = vadd.f32 %v1999, %v2271
        %v2282 = vld [vmem:[%s1829] sm:$0xe]
        %v2283 = vld [vmem:[%s1829 + $0x8] sm:$0xe]
        %v2284 = vld [vmem:[%s1829 + $0x10] sm:$0xe]
        %v2285 = vld [vmem:[%s1829 + $0x18] sm:$0xe]
        %v2286 = vld [vmem:[%s1829 + $0x20] sm:$0xe]
        %v2287 = vld [vmem:[%s1829 + $0x28] sm:$0xe]
        %v2288 = vld [vmem:[%s1829 + $0x30] sm:$0xe]
        %v2289 = vld [vmem:[%s1829 + $0x38] sm:$0xe]
        %v2306 = vrot.slane %v2282, 5
        %v2307 = vrot.slane %v2306, 4
        %v2308 = vrot.slane %v2001, 5
        %v2309 = vsel %vm980, %v2307, %v2308
        %v2310 = vrot.slane %v2283, 5
        %v2311 = vrot.slane %v2310, 4
        %v2312 = vrot.slane %v2003, 5
        %v2313 = vsel %vm980, %v2311, %v2312
        %v2314 = vrot.slane %v2284, 5
        %v2315 = vrot.slane %v2314, 4
        %v2316 = vrot.slane %v2005, 5
        %v2317 = vsel %vm980, %v2315, %v2316
        %v2318 = vrot.slane %v2285, 5
        %v2319 = vrot.slane %v2318, 4
        %v2320 = vrot.slane %v2007, 5
        %v2321 = vsel %vm980, %v2319, %v2320
        %v2322 = vrot.slane %v2286, 5
        %v2323 = vrot.slane %v2322, 4
        %v2324 = vrot.slane %v2009, 5
        %v2325 = vsel %vm980, %v2323, %v2324
        %v2326 = vrot.slane %v2287, 5
        %v2327 = vrot.slane %v2326, 4
        %v2328 = vrot.slane %v2011, 5
        %v2329 = vsel %vm980, %v2327, %v2328
        %v2330 = vrot.slane %v2288, 5
        %v2331 = vrot.slane %v2330, 4
        %v2332 = vrot.slane %v2013, 5
        %v2333 = vsel %vm980, %v2331, %v2332
        %v2334 = vrot.slane %v2289, 5
        %v2335 = vrot.slane %v2334, 4
        %v2336 = vrot.slane %v2015, 5
        %v2337 = vsel %vm980, %v2335, %v2336
        %s2338 = scalar_lea.vmem [#allocation6], 512
        %v2339 = vld [vmem:[%s2338] sm:$0xf]
        %v2340 = vld [vmem:[%s2338 + $0x4] sm:$0xf]
        %v2341 = vld [vmem:[%s2338 + $0x8] sm:$0xf]
        %v2342 = vld [vmem:[%s2338 + $0xc] sm:$0xf]
        %v2343 = vld [vmem:[%s2338 + $0x10] sm:$0xf]
        %v2344 = vld [vmem:[%s2338 + $0x14] sm:$0xf]
        %v2345 = vld [vmem:[%s2338 + $0x18] sm:$0xf]
        %v2346 = vld [vmem:[%s2338 + $0x1c] sm:$0xf]
        %v2347 = vld [vmem:[%s2338 + $0x20] sm:$0xf]
        %v2348 = vld [vmem:[%s2338 + $0x24] sm:$0xf]
        %v2349 = vld [vmem:[%s2338 + $0x28] sm:$0xf]
        %v2350 = vld [vmem:[%s2338 + $0x2c] sm:$0xf]
        %v2351 = vld [vmem:[%s2338 + $0x30] sm:$0xf]
        %v2352 = vld [vmem:[%s2338 + $0x34] sm:$0xf]
        %v2353 = vld [vmem:[%s2338 + $0x38] sm:$0xf]
        %v2354 = vld [vmem:[%s2338 + $0x3c] sm:$0xf]
        %v2355 = vunpack.c.l.b16 %v2309
        %v2356 = vunpack.c.l.b16 %v2313
        %v2357 = vunpack.c.l.b16 %v2317
        %v2358 = vunpack.c.l.b16 %v2321
        %v2359 = vunpack.c.l.b16 %v2325
        %v2360 = vunpack.c.l.b16 %v2329
        %v2361 = vunpack.c.l.b16 %v2333
        %v2362 = vunpack.c.l.b16 %v2337
        %v2363 = vpack.c.b16 %v2356, %v2355
        %v2364 = vpack.c.b16 %v2358, %v2357
        %v2365 = vpack.c.b16 %v2360, %v2359
        %v2366 = vpack.c.b16 %v2362, %v2361
        %v2387 = vunpack.c.l.b16 %v2339
        %v2388 = vunpack.c.l.b16 %v2340
        %v2389 = vunpack.c.l.b16 %v2341
        %v2390 = vunpack.c.l.b16 %v2342
        %v2391 = vunpack.c.l.b16 %v2343
        %v2392 = vunpack.c.l.b16 %v2344
        %v2393 = vunpack.c.l.b16 %v2345
        %v2394 = vunpack.c.l.b16 %v2346
        %v2395 = vunpack.c.l.b16 %v2347
        %v2396 = vunpack.c.l.b16 %v2348
        %v2397 = vunpack.c.l.b16 %v2349
        %v2398 = vunpack.c.l.b16 %v2350
        %v2399 = vunpack.c.l.b16 %v2351
        %v2400 = vunpack.c.l.b16 %v2352
        %v2401 = vunpack.c.l.b16 %v2353
        %v2402 = vunpack.c.l.b16 %v2354
        %v2403 = vpack.c.b16 %v2388, %v2387
        %v2404 = vpack.c.b16 %v2390, %v2389
        %v2405 = vpack.c.b16 %v2392, %v2391
        %v2406 = vpack.c.b16 %v2394, %v2393
        %v2407 = vpack.c.b16 %v2396, %v2395
        %v2408 = vpack.c.b16 %v2398, %v2397
        %v2409 = vpack.c.b16 %v2400, %v2399
        %v2410 = vpack.c.b16 %v2402, %v2401
        %2419 = vmatprep.subr.bf16.mxu0 0
        %2420 = vmatpush1.bf16.msra.mxu0 %v2403
        %2421 = vmatprep.subr.bf16.mxu0 0
        %2422 = vmatpush1.bf16.msra.mxu0 %v2404
        %2423 = vmatprep.subr.bf16.mxu0 0
        %2424 = vmatpush1.bf16.msra.mxu0 %v2405
        %2425 = vmatprep.subr.bf16.mxu0 0
        %2426 = vmatpush1.bf16.msra.mxu0 %v2406
        %2427 = vmatprep.subr.bf16.mxu0 0
        %2428 = vmatpush1.bf16.msra.mxu0 %v2407
        %2429 = vmatprep.subr.bf16.mxu0 0
        %2430 = vmatpush1.bf16.msra.mxu0 %v2408
        %2431 = vmatprep.subr.bf16.mxu0 0
        %2432 = vmatpush1.bf16.msra.mxu0 %v2409
        %2433 = vmatprep.subr.bf16.mxu0 0
        %2434 = vmatpush1.bf16.msra.mxu0 %v2410
        %2435 = vmatprep.subr.bf16.mxu0 0
        %2436 = vmatpush1.bf16.msra.mxu0 0
        %2437 = vmatprep.subr.bf16.mxu0 0
        %2438 = vmatpush1.bf16.msra.mxu0 0
        %2439 = vmatprep.subr.bf16.mxu0 0
        %2440 = vmatpush1.bf16.msra.mxu0 0
        %2441 = vmatprep.subr.bf16.mxu0 0
        %2442 = vmatpush1.bf16.msra.mxu0 0
        %2443 = vmatprep.subr.bf16.mxu0 0
        %2444 = vmatpush1.bf16.msra.mxu0 0
        %2445 = vmatprep.subr.bf16.mxu0 0
        %2446 = vmatpush1.bf16.msra.mxu0 0
        %2447 = vmatprep.subr.bf16.mxu0 0
        %2448 = vmatpush1.bf16.msra.mxu0 0
        %2449 = vmatprep.subr.bf16.mxu0 0
        %2450 = vmatpush1.bf16.msra.mxu0 0
        %2451 = vmatprep.mubr.bf16.mxu0 0
        %2452 = vmatmul.mubr.bf16.gmra.mrb[0].mxu0 %v2363
        %v2453 = vpop.f32.mrb[0].mxu0
        %v2454 = vadd.f32 0.0, %v2453
        %v2455 = vpop.f32.mrb[0].mxu0
        %v2456 = vpop.f32.mrb[0].mxu0
        %v2457 = vadd.f32 0.0, %v2456
        %v2458 = vpop.f32.mrb[0].mxu0
        %2459 = vmatprep.mubr.bf16.mxu0 0
        %2460 = vmatmul.mubr.bf16.gmra.mrb[0].mxu0 %v2364
        %v2461 = vpop.f32.mrb[0].mxu0
        %v2462 = vadd.f32 0.0, %v2461
        %v2463 = vpop.f32.mrb[0].mxu0
        %v2464 = vpop.f32.mrb[0].mxu0
        %v2465 = vadd.f32 0.0, %v2464
        %v2466 = vpop.f32.mrb[0].mxu0
        %2467 = vmatprep.mubr.bf16.mxu0 0
        %2468 = vmatmul.mubr.bf16.gmra.mrb[0].mxu0 %v2365
        %v2469 = vpop.f32.mrb[0].mxu0
        %v2470 = vadd.f32 0.0, %v2469
        %v2471 = vpop.f32.mrb[0].mxu0
        %v2472 = vpop.f32.mrb[0].mxu0
        %v2473 = vadd.f32 0.0, %v2472
        %v2474 = vpop.f32.mrb[0].mxu0
        %2475 = vmatprep.mubr.bf16.mxu0 0
        %2476 = vmatmul.mubr.bf16.gmra.mrb[0].mxu0 %v2366
        %v2477 = vpop.f32.mrb[0].mxu0
        %v2478 = vadd.f32 0.0, %v2477
        %v2479 = vpop.f32.mrb[0].mxu0
        %v2480 = vpop.f32.mrb[0].mxu0
        %v2481 = vadd.f32 0.0, %v2480
        %v2482 = vpop.f32.mrb[0].mxu0
        %2483 = vdwg.mxu0
        %v2484 = vadd.f32 %v2274, %v2454
        %v2485 = vadd.f32 %v2275, %v2457
        %v2486 = vadd.f32 %v2276, %v2462
        %v2487 = vadd.f32 %v2277, %v2465
        %v2488 = vadd.f32 %v2278, %v2470
        %v2489 = vadd.f32 %v2279, %v2473
        %v2490 = vadd.f32 %v2280, %v2478
        %v2491 = vadd.f32 %v2281, %v2481
        %v2492 = vpack.c.bf16 %v2485, %v2484
        %v2493 = vpack.c.bf16 %v2487, %v2486
        %v2494 = vpack.c.bf16 %v2489, %v2488
        %v2495 = vpack.c.bf16 %v2491, %v2490
        %v2500 = vunpack.c.l.b16 %v2492
        %v2501 = vunpack.c.h.b16 %v2492
        %v2502 = vunpack.c.l.b16 %v2493
        %v2503 = vunpack.c.h.b16 %v2493
        %v2504 = vunpack.c.l.b16 %v2494
        %v2505 = vunpack.c.h.b16 %v2494
        %v2506 = vunpack.c.l.b16 %v2495
        %v2507 = vunpack.c.h.b16 %v2495
        %v2508 = vpack.c.b16 %v2500, %v2500
        %v2509 = vpack.c.b16 %v2501, %v2501
        %v2510 = vpack.c.b16 %v2502, %v2502
        %v2511 = vpack.c.b16 %v2503, %v2503
        %v2512 = vpack.c.b16 %v2504, %v2504
        %v2513 = vpack.c.b16 %v2505, %v2505
        %v2514 = vpack.c.b16 %v2506, %v2506
        %v2515 = vpack.c.b16 %v2507, %v2507
        %2524 = vst [vmem:[%s234] sm:$0xf] %v2508
        %2525 = vst [vmem:[%s234 + $0x4] sm:$0xf] %v2509
        %2526 = vst [vmem:[%s234 + $0x8] sm:$0xf] %v2510
        %2527 = vst [vmem:[%s234 + $0xc] sm:$0xf] %v2511
        %2528 = vst [vmem:[%s234 + $0x10] sm:$0xf] %v2512
        %2529 = vst [vmem:[%s234 + $0x14] sm:$0xf] %v2513
        %2530 = vst [vmem:[%s234 + $0x18] sm:$0xf] %v2514
        %2531 = vst [vmem:[%s234 + $0x1c] sm:$0xf] %v2515
        %v2532 = vadd.f32 %v2484, %v2485
        %v2533 = vadd.f32 %v2532, %v2486
        %v2534 = vadd.f32 %v2533, %v2487
        %v2535 = vadd.f32 %v2534, %v2488
        %v2536 = vadd.f32 %v2535, %v2489
        %v2537 = vadd.f32 %v2536, %v2490
        %v2538 = vadd.f32 %v2537, %v2491
        %v2539 = vrot.slane %v2538, 4
        %v2540 = vadd.f32 %v2538, %v2539
        %v2541 = vrot.slane %v2540, 2
        %v2542 = vadd.f32 %v2540, %v2541
        %v2543 = vrot.slane %v2542, 1
        %v2544 = vadd.f32 %v2542, %v2543
        %v2545 = vadd.f32 %v2544, 0.0
        %v2546 = vmul.f32 %v2484, %v2484
        %v2547 = vmul.f32 %v2485, %v2485
        %v2548 = vmul.f32 %v2486, %v2486
        %v2549 = vmul.f32 %v2487, %v2487
        %v2550 = vmul.f32 %v2488, %v2488
        %v2551 = vmul.f32 %v2489, %v2489
        %v2552 = vmul.f32 %v2490, %v2490
        %v2553 = vmul.f32 %v2491, %v2491
        %v2554 = vadd.f32 %v2546, %v2547
        %v2555 = vadd.f32 %v2554, %v2548
        %v2556 = vadd.f32 %v2555, %v2549
        %v2557 = vadd.f32 %v2556, %v2550
        %v2558 = vadd.f32 %v2557, %v2551
        %v2559 = vadd.f32 %v2558, %v2552
        %v2560 = vadd.f32 %v2559, %v2553
        %v2561 = vrot.slane %v2560, 4
        %v2562 = vadd.f32 %v2560, %v2561
        %v2563 = vrot.slane %v2562, 2
        %v2564 = vadd.f32 %v2562, %v2563
        %v2565 = vrot.slane %v2564, 1
        %v2566 = vadd.f32 %v2564, %v2565
        %v2567 = vadd.f32 %v2566, 0.0
        %2568 = vst [vmem:[%s240] sm:$0x1] %v2545
        %2569 = vst [vmem:[%s246] sm:$0x1] %v2567
        %s2570 = sand.u32 %s81, 1
        %s2571 = scalar_lea.sflag [#allocation5], %s2570
        %s2572 = sand.u32 %s81, 1
        %s2573 = smul.addr %s2572, 32
        %s2574 = scalar_lea.vmem [#allocation8], %s2573
        %s2575 = sand.u32 %s26, 1
        %s2576 = scalar_lea.sflag [#allocation10], %s2575
        %s2577 = sand.u32 %s107, 1
        %s2578 = scalar_lea.vmem [#allocation9], %s2577
        %s2579 = sand.u32 %s26, 1
        %s2580 = scalar_lea.sflag [#allocation10], %s2579
        %s2581 = sand.u32 %s133, 1
        %s2582 = scalar_lea.vmem [#allocation11], %s2581
        // Predicated region
        $region37: #{tpu_custom_call.1} parent=27 // pred_check
          %p2583 = pneg %p91
        $region38: #{tpu_custom_call.1} parent=27 // pred_check_branch
          %2585 = sbr.rel (%p2583) target = $region40
        $region39: #{tpu_custom_call.1} parent=27 // pred_region
          %s2587 = ssub.s32 512, 512
          %2588 = vsyncadd %s2571, %s2587
          %s2589 = smul.addr %s26, 8
          %s2590 = smul.addr %s2589, 64
          %s2591 = scalar_lea.hbm %s2, %s2590
          %s2592 = sshll.u32 %s2574, 4
          %s2593 = int_to_ptr.vmem [resolvable:$true] %s2592
          %2598 = dma.vmem_to_hbm [thread:$0]  %s2593, 512, %s2591, %s2571, 64, 64, 4
        $region40: #{tpu_custom_call.1} parent=27 // pred_fallthru
          _
        // Predicated region
        $region41: #{tpu_custom_call.1} parent=27 // pred_check
          %p2599 = pneg %p117
        $region42: #{tpu_custom_call.1} parent=27 // pred_check_branch
          %2601 = sbr.rel (%p2599) target = $region44
        $region43: #{tpu_custom_call.1} parent=27 // pred_region
          %s2603 = ssub.s32 16, 16
          %2604 = vsyncadd %s2576, %s2603
          %s2605 = smul.addr %s26, 16
          %s2606 = scalar_lea.hbm %s3, %s2605
          %s2608 = sshll.u32 %s2578, 4
          %s2609 = int_to_ptr.vmem [resolvable:$true] %s2608
          %2611 = dma.vmem_to_hbm [thread:$0]  %s2609, 16, %s2606, %s2576
        $region44: #{tpu_custom_call.1} parent=27 // pred_fallthru
          _
        // Predicated region
        $region45: #{tpu_custom_call.1} parent=27 // pred_check
          %p2612 = pneg %p143
        $region46: #{tpu_custom_call.1} parent=27 // pred_check_branch
          %2614 = sbr.rel (%p2612) target = $region48
        $region47: #{tpu_custom_call.1} parent=27 // pred_region
          %s2616 = ssub.s32 16, 16
          %2617 = vsyncadd %s2580, %s2616
          %s2618 = smul.addr %s26, 16
          %s2619 = scalar_lea.hbm %s4, %s2618
          %s2621 = sshll.u32 %s2582, 4
          %s2622 = int_to_ptr.vmem [resolvable:$true] %s2621
          %2624 = dma.vmem_to_hbm [thread:$0]  %s2622, 16, %s2619, %s2580
        $region48: #{tpu_custom_call.1} parent=27 // pred_fallthru
          _
      $region28: #{tpu_custom_call.1} parent=5 // pred_fallthru
        _
      %p2625 = scmp.le.s32.totalorder 2, %s21
      // Predicated region
      $region49: #{tpu_custom_call.1} parent=5 // pred_check
        %p2626 = pneg %p2625
      $region50: #{tpu_custom_call.1} parent=5 // pred_check_branch
        %2628 = sbr.rel (%p2626) target = $region52
      $region51: #{tpu_custom_call.1} parent=5 // pred_region
        %s2629 = ssub.s32 %s21, 2
        // Predicated region
        $region53: #{tpu_custom_call.1} parent=51 // pred_check
          %p2630 = pneg %p97
        $region54: #{tpu_custom_call.1} parent=51 // pred_check_branch
          %2632 = sbr.rel (%p2630) target = $region56
        $region55: #{tpu_custom_call.1} parent=51 // pred_region
          %s2633 = sand.u32 %s82, 1
          %s2634 = scalar_lea.sflag [#allocation5], %s2633
          %s2635 = sand.u32 %s82, 1
          %s2636 = smul.addr %s2635, 32
          %s2637 = scalar_lea.vmem [#allocation8], %s2636
          %2638 = dma.done %s2634, 512
        $region56: #{tpu_custom_call.1} parent=51 // pred_fallthru
          _
        // Predicated region
        $region57: #{tpu_custom_call.1} parent=51 // pred_check
          %p2639 = pneg %p123
        $region58: #{tpu_custom_call.1} parent=51 // pred_check_branch
          %2641 = sbr.rel (%p2639) target = $region60
        $region59: #{tpu_custom_call.1} parent=51 // pred_region
          %s2642 = sand.u32 %s27, 1
          %s2643 = scalar_lea.sflag [#allocation10], %s2642
          %s2644 = sand.u32 %s108, 1
          %s2645 = scalar_lea.vmem [#allocation9], %s2644
          %2646 = dma.done %s2643, 16
        $region60: #{tpu_custom_call.1} parent=51 // pred_fallthru
          _
        // Predicated region
        $region61: #{tpu_custom_call.1} parent=51 // pred_check
          %p2647 = pneg %p149
        $region62: #{tpu_custom_call.1} parent=51 // pred_check_branch
          %2649 = sbr.rel (%p2647) target = $region64
        $region63: #{tpu_custom_call.1} parent=51 // pred_region
          %s2650 = sand.u32 %s27, 1
          %s2651 = scalar_lea.sflag [#allocation10], %s2650
          %s2652 = sand.u32 %s134, 1
          %s2653 = scalar_lea.vmem [#allocation11], %s2652
          %2654 = dma.done %s2651, 16
        $region64: #{tpu_custom_call.1} parent=51 // pred_fallthru
          _
      $region52: #{tpu_custom_call.1} parent=5 // pred_fallthru
        _
    $region6: #{tpu_custom_call.1} parent=1 // loop_footer
      %s25 = sadd.s32 1, %s21
    $region7: #{tpu_custom_call.1} parent=1 // loop_footer_branch
      %20 = sbr.rel target = $region3
    $region8: #{tpu_custom_call.1} parent=1 // loop_exit
      _
    %2655 = vsyncpa [#allocation4], 1
    %s2656 = scalar_lea.sflag [#allocation4], 1
    %2657 = vsyncpa %s2656, 1
    %2658 = vsyncpa [#allocation7], 1
    %2659 = vsyncpa [#allocation5], 1
    %s2660 = scalar_lea.sflag [#allocation5], 1
    %2661 = vsyncpa %s2660, 1
    %2662 = vsyncpa [#allocation10], 1
    %s2663 = scalar_lea.sflag [#allocation10], 1
    %2664 = vsyncpa %s2663, 1

</llo_original>
